<compile_context>
chip_gen: v5e
topology: v5e:2x2
jax: 0.10.0
libtpu: 0.0.40
codegen_flags: <defaults>
</compile_context>

<pallas_src>
import math
import jax
import jax.numpy as jnp
from jax import lax
from jax.experimental import pallas as pl
from jax.experimental.pallas import tpu as pltpu

TOTAL_BONES = 24
N_JOINTS = TOTAL_BONES - 1            # 23
EMBEDDING_SIZE = 69
MLP_WIDTH = 256
MLP_DEPTH = 4
OUT_DIM = 3 * N_JOINTS                # 69 (logical MLP output width)
OUT_DIM_PAD = 128                     # lane-dense padded final layer width


# ---------------------------------------------------------------------------
# Fused kernel: (Linear -> ReLU) * MLP_DEPTH + final Linear + Rodrigues
# ---------------------------------------------------------------------------
def fused_kernel(x_ref, *refs):
    out_ref = refs[-1]                 # (9, B, 23) f32
    wb_refs = refs[:-1]
    n_layers = len(wb_refs) // 2

    h = x_ref[...]                     # (B, 69) f32
    for i in range(n_layers):
        w = wb_refs[2 * i][...]        # bf16 (in, out)
        b = wb_refs[2 * i + 1][...]    # f32  (1, out)
        acc = jnp.dot(h.astype(jnp.bfloat16), w,
                      preferred_element_type=jnp.float32)
        h = acc + b                    # f32
        if i < n_layers - 1:
            h = jnp.maximum(h, 0.0)    # ReLU in f32 on the VPU

    # h: (B, 128) f32, columns grouped [x(23) | y(23) | z(23) | zero pad]
    rx = h[:, 0:N_JOINTS]
    ry = h[:, N_JOINTS:2 * N_JOINTS]
    rz = h[:, 2 * N_JOINTS:3 * N_JOINTS]

    # theta = sqrt(1e-5 + |r|^2)  (eps inside sqrt, exactly as the PyTorch ref)
    sumsq = 1e-05 + rx * rx + ry * ry + rz * rz          # (B, 23)
    inv_theta = lax.rsqrt(sumsq)                          # EUP
    theta = sumsq * inv_theta                             # == sqrt(sumsq)
    nx = rx * inv_theta
    ny = ry * inv_theta
    nz = rz * inv_theta
    costh = jnp.cos(theta)
    sinth = jnp.sin(theta)
    one_c = 1.0 - costh

    out_ref[0, :, :] = nx * nx + (1.0 - nx * nx) * costh
    out_ref[1, :, :] = nx * ny * one_c - nz * sinth
    out_ref[2, :, :] = nx * nz * one_c + ny * sinth
    out_ref[3, :, :] = nx * ny * one_c + nz * sinth
    out_ref[4, :, :] = ny * ny + (1.0 - ny * ny) * costh
    out_ref[5, :, :] = ny * nz * one_c - nx * sinth
    out_ref[6, :, :] = nx * nz * one_c - ny * sinth
    out_ref[7, :, :] = ny * nz * one_c + nx * sinth
    out_ref[8, :, :] = nz * nz + (1.0 - nz * nz) * costh


# ---------------------------------------------------------------------------
# Wrapper
# ---------------------------------------------------------------------------
def body_pose_refiner_forward(pose_input, params):
    B = pose_input.shape[0]
    vmem = pl.BlockSpec(memory_space=pltpu.MemorySpace.VMEM)

    flops = 2 * B * (EMBEDDING_SIZE * MLP_WIDTH
                     + (MLP_DEPTH - 1) * MLP_WIDTH * MLP_WIDTH
                     + MLP_WIDTH * OUT_DIM_PAD)
    bytes_accessed = int(
        pose_input.size * 4
        + sum(int(p.size) * p.dtype.itemsize for p in params)
        + 9 * B * N_JOINTS * 4)

    out = pl.pallas_call(
        fused_kernel,
        out_shape=jax.ShapeDtypeStruct((9, B, N_JOINTS), jnp.float32),
        in_specs=[vmem] * (1 + len(params)),
        out_specs=vmem,
        cost_estimate=pl.CostEstimate(
            flops=int(flops),
            transcendentals=3 * B * N_JOINTS,
            bytes_accessed=bytes_accessed),
    )(pose_input, *params)

    # (9, B, 23) -> (B, 23, 9) -> (B*23, 3, 3); row n = b*23 + joint, matching
    # the original .view(-1, 3) ordering (permuted weight layout undone here).
    Rs = jnp.transpose(out, (1, 2, 0)).reshape(B * N_JOINTS, 3, 3)
    return {"Rs": Rs}


# ---------------------------------------------------------------------------
# Deterministic parameter init (mirrors initseq / xavier_uniform_ semantics),
# weights cast to bf16, final layer column-permuted + lane-padded to 128.
# ---------------------------------------------------------------------------
def init_params(key):
    gain_relu = math.sqrt(2.0)                    # nn.init.calculate_gain('relu')
    dims = [EMBEDDING_SIZE] + [MLP_WIDTH] * MLP_DEPTH
    keys = jax.random.split(key, MLP_DEPTH + 1)
    params = []
    # hidden layers: xavier-uniform(relu gain), zero bias
    for i, (n1, n2) in enumerate(zip(dims[:-1], dims[1:])):
        std = gain_relu * math.sqrt(2.0 / (n1 + n2))
        bound = std * math.sqrt(3.0)
        w = jax.random.uniform(keys[i], (n1, n2), jnp.float32, -bound, bound)
        params += [w.astype(jnp.bfloat16), jnp.zeros((1, n2), jnp.float32)]
    # last layer: uniform(-1e-5, 1e-5), zero bias; permute columns from the
    # interleaved (x,y,z)*23 order to grouped [x(23)|y(23)|z(23)], pad to 128.
    w_last = jax.random.uniform(keys[-1], (MLP_WIDTH, OUT_DIM),
                                jnp.float32, -1e-05, 1e-05)
    perm = jnp.concatenate([jnp.arange(N_JOINTS) * 3 + c for c in range(3)])
    w_last = w_last[:, perm]
    w_last = jnp.pad(w_last, ((0, 0), (0, OUT_DIM_PAD - OUT_DIM)))
    params += [w_last.astype(jnp.bfloat16), jnp.zeros((1, OUT_DIM_PAD), jnp.float32)]
    return params


if __name__ == "__main__":
    key = jax.random.PRNGKey(0)
    k_params, k_input = jax.random.split(key)

    params = init_params(k_params)

    batch = 2
    pose_input = jax.random.normal(k_input, (batch, EMBEDDING_SIZE), jnp.float32)

    out = body_pose_refiner_forward(pose_input, params)
    Rs = jax.block_until_ready(out["Rs"])

    assert Rs.shape == (batch * N_JOINTS, 3, 3)
    assert Rs.dtype == jnp.float32
    assert bool(jnp.all(jnp.isfinite(Rs)))
    print("KERNEL_OK")
</pallas_src>

<mosaic_0001>
module attributes {stable_mosaic.version = 11 : i64} {
  func.func @fused_kernel(%arg0: memref<2x69xf32, #tpu.memory_space<vmem>>, %arg1: memref<69x256xbf16, #tpu.memory_space<vmem>>, %arg2: memref<1x256xf32, #tpu.memory_space<vmem>>, %arg3: memref<256x256xbf16, #tpu.memory_space<vmem>>, %arg4: memref<1x256xf32, #tpu.memory_space<vmem>>, %arg5: memref<256x256xbf16, #tpu.memory_space<vmem>>, %arg6: memref<1x256xf32, #tpu.memory_space<vmem>>, %arg7: memref<256x256xbf16, #tpu.memory_space<vmem>>, %arg8: memref<1x256xf32, #tpu.memory_space<vmem>>, %arg9: memref<256x128xbf16, #tpu.memory_space<vmem>>, %arg10: memref<1x128xf32, #tpu.memory_space<vmem>>, %arg11: memref<9x2x23xf32, #tpu.memory_space<vmem>>) attributes {dimension_semantics = [], scalar_prefetch = 0 : i64, scratch_operands = 0 : i64, tpu.core_type = #tpu.core_type<tc>} {
    %c0 = arith.constant 0 : index
    %c0_0 = arith.constant 0 : index
    %0 = vector.load %arg0[%c0, %c0_0] : memref<2x69xf32, #tpu.memory_space<vmem>>, vector<2x69xf32>
    %c0_1 = arith.constant 0 : index
    %c0_2 = arith.constant 0 : index
    %1 = vector.load %arg1[%c0_1, %c0_2] : memref<69x256xbf16, #tpu.memory_space<vmem>>, vector<69x256xbf16>
    %c0_3 = arith.constant 0 : index
    %c0_4 = arith.constant 0 : index
    %2 = vector.load %arg2[%c0_3, %c0_4] : memref<1x256xf32, #tpu.memory_space<vmem>>, vector<1x256xf32>
    %3 = arith.truncf %0 : vector<2x69xf32> to vector<2x69xbf16>
    %cst = arith.constant dense<0.000000e+00> : vector<2x256xf32>
    %4 = tpu.matmul %3, %1, %cst {dimension_numbers = #tpu.dot_dimension_numbers<[1], [0], [0], [1], [0, 0, 1, 1], [], []>} : vector<2x69xbf16>, vector<69x256xbf16>, vector<2x256xf32> -> vector<2x256xf32>
    %5 = vector.broadcast %2 : vector<1x256xf32> to vector<2x256xf32>
    %6 = arith.addf %4, %5 : vector<2x256xf32>
    %cst_5 = arith.constant 0.000000e+00 : f32
    %7 = vector.broadcast %cst_5 : f32 to vector<2x256xf32>
    %8 = arith.maximumf %6, %7 : vector<2x256xf32>
    %c0_6 = arith.constant 0 : index
    %c0_7 = arith.constant 0 : index
    %9 = vector.load %arg3[%c0_6, %c0_7] : memref<256x256xbf16, #tpu.memory_space<vmem>>, vector<256x256xbf16>
    %c0_8 = arith.constant 0 : index
    %c0_9 = arith.constant 0 : index
    %10 = vector.load %arg4[%c0_8, %c0_9] : memref<1x256xf32, #tpu.memory_space<vmem>>, vector<1x256xf32>
    %11 = arith.truncf %8 : vector<2x256xf32> to vector<2x256xbf16>
    %cst_10 = arith.constant dense<0.000000e+00> : vector<2x256xf32>
    %12 = tpu.matmul %11, %9, %cst_10 {dimension_numbers = #tpu.dot_dimension_numbers<[1], [0], [0], [1], [0, 0, 1, 1], [], []>} : vector<2x256xbf16>, vector<256x256xbf16>, vector<2x256xf32> -> vector<2x256xf32>
    %13 = vector.broadcast %10 : vector<1x256xf32> to vector<2x256xf32>
    %14 = arith.addf %12, %13 : vector<2x256xf32>
    %cst_11 = arith.constant 0.000000e+00 : f32
    %15 = vector.broadcast %cst_11 : f32 to vector<2x256xf32>
    %16 = arith.maximumf %14, %15 : vector<2x256xf32>
    %c0_12 = arith.constant 0 : index
    %c0_13 = arith.constant 0 : index
    %17 = vector.load %arg5[%c0_12, %c0_13] : memref<256x256xbf16, #tpu.memory_space<vmem>>, vector<256x256xbf16>
    %c0_14 = arith.constant 0 : index
    %c0_15 = arith.constant 0 : index
    %18 = vector.load %arg6[%c0_14, %c0_15] : memref<1x256xf32, #tpu.memory_space<vmem>>, vector<1x256xf32>
    %19 = arith.truncf %16 : vector<2x256xf32> to vector<2x256xbf16>
    %cst_16 = arith.constant dense<0.000000e+00> : vector<2x256xf32>
    %20 = tpu.matmul %19, %17, %cst_16 {dimension_numbers = #tpu.dot_dimension_numbers<[1], [0], [0], [1], [0, 0, 1, 1], [], []>} : vector<2x256xbf16>, vector<256x256xbf16>, vector<2x256xf32> -> vector<2x256xf32>
    %21 = vector.broadcast %18 : vector<1x256xf32> to vector<2x256xf32>
    %22 = arith.addf %20, %21 : vector<2x256xf32>
    %cst_17 = arith.constant 0.000000e+00 : f32
    %23 = vector.broadcast %cst_17 : f32 to vector<2x256xf32>
    %24 = arith.maximumf %22, %23 : vector<2x256xf32>
    %c0_18 = arith.constant 0 : index
    %c0_19 = arith.constant 0 : index
    %25 = vector.load %arg7[%c0_18, %c0_19] : memref<256x256xbf16, #tpu.memory_space<vmem>>, vector<256x256xbf16>
    %c0_20 = arith.constant 0 : index
    %c0_21 = arith.constant 0 : index
    %26 = vector.load %arg8[%c0_20, %c0_21] : memref<1x256xf32, #tpu.memory_space<vmem>>, vector<1x256xf32>
    %27 = arith.truncf %24 : vector<2x256xf32> to vector<2x256xbf16>
    %cst_22 = arith.constant dense<0.000000e+00> : vector<2x256xf32>
    %28 = tpu.matmul %27, %25, %cst_22 {dimension_numbers = #tpu.dot_dimension_numbers<[1], [0], [0], [1], [0, 0, 1, 1], [], []>} : vector<2x256xbf16>, vector<256x256xbf16>, vector<2x256xf32> -> vector<2x256xf32>
    %29 = vector.broadcast %26 : vector<1x256xf32> to vector<2x256xf32>
    %30 = arith.addf %28, %29 : vector<2x256xf32>
    %cst_23 = arith.constant 0.000000e+00 : f32
    %31 = vector.broadcast %cst_23 : f32 to vector<2x256xf32>
    %32 = arith.maximumf %30, %31 : vector<2x256xf32>
    %c0_24 = arith.constant 0 : index
    %c0_25 = arith.constant 0 : index
    %33 = vector.load %arg9[%c0_24, %c0_25] : memref<256x128xbf16, #tpu.memory_space<vmem>>, vector<256x128xbf16>
    %c0_26 = arith.constant 0 : index
    %c0_27 = arith.constant 0 : index
    %34 = vector.load %arg10[%c0_26, %c0_27] : memref<1x128xf32, #tpu.memory_space<vmem>>, vector<1x128xf32>
    %35 = arith.truncf %32 : vector<2x256xf32> to vector<2x256xbf16>
    %cst_28 = arith.constant dense<0.000000e+00> : vector<2x128xf32>
    %36 = tpu.matmul %35, %33, %cst_28 {dimension_numbers = #tpu.dot_dimension_numbers<[1], [0], [0], [1], [0, 0, 1, 1], [], []>} : vector<2x256xbf16>, vector<256x128xbf16>, vector<2x128xf32> -> vector<2x128xf32>
    %37 = vector.broadcast %34 : vector<1x128xf32> to vector<2x128xf32>
    %38 = arith.addf %36, %37 : vector<2x128xf32>
    %39 = vector.extract_strided_slice %38 {offsets = [0, 0], sizes = [2, 23], strides = [1, 1]} : vector<2x128xf32> to vector<2x23xf32>
    %40 = vector.extract_strided_slice %38 {offsets = [0, 23], sizes = [2, 23], strides = [1, 1]} : vector<2x128xf32> to vector<2x23xf32>
    %41 = vector.extract_strided_slice %38 {offsets = [0, 46], sizes = [2, 23], strides = [1, 1]} : vector<2x128xf32> to vector<2x23xf32>
    %42 = arith.mulf %39, %39 : vector<2x23xf32>
    %cst_29 = arith.constant 9.99999974E-6 : f32
    %43 = vector.broadcast %cst_29 : f32 to vector<2x23xf32>
    %44 = arith.addf %43, %42 : vector<2x23xf32>
    %45 = arith.mulf %40, %40 : vector<2x23xf32>
    %46 = arith.addf %44, %45 : vector<2x23xf32>
    %47 = arith.mulf %41, %41 : vector<2x23xf32>
    %48 = arith.addf %46, %47 : vector<2x23xf32>
    %49 = math.rsqrt %48 : vector<2x23xf32>
    %50 = arith.mulf %48, %49 : vector<2x23xf32>
    %51 = arith.mulf %39, %49 : vector<2x23xf32>
    %52 = arith.mulf %40, %49 : vector<2x23xf32>
    %53 = arith.mulf %41, %49 : vector<2x23xf32>
    %54 = math.cos %50 : vector<2x23xf32>
    %55 = math.sin %50 : vector<2x23xf32>
    %cst_30 = arith.constant 1.000000e+00 : f32
    %56 = vector.broadcast %cst_30 : f32 to vector<2x23xf32>
    %57 = arith.subf %56, %54 : vector<2x23xf32>
    %58 = arith.mulf %51, %51 : vector<2x23xf32>
    %59 = arith.mulf %51, %51 : vector<2x23xf32>
    %cst_31 = arith.constant 1.000000e+00 : f32
    %60 = vector.broadcast %cst_31 : f32 to vector<2x23xf32>
    %61 = arith.subf %60, %59 : vector<2x23xf32>
    %62 = arith.mulf %61, %54 : vector<2x23xf32>
    %63 = arith.addf %58, %62 : vector<2x23xf32>
    %c0_32 = arith.constant 0 : index
    %c0_33 = arith.constant 0 : index
    %c0_34 = arith.constant 0 : index
    %64 = vector.load %arg11[%c0_32, %c0_33, %c0_34] : memref<9x2x23xf32, #tpu.memory_space<vmem>>, vector<1x2x23xf32>
    %65 = vector.shape_cast %64 : vector<1x2x23xf32> to vector<2x23xf32>
    %66 = vector.shape_cast %63 : vector<2x23xf32> to vector<1x2x23xf32>
    tpu.vector_store %arg11[%c0_32, %c0_33, %c0_34], %66 {strides = array<i32>} : memref<9x2x23xf32, #tpu.memory_space<vmem>>, vector<1x2x23xf32>,
    %67 = arith.mulf %51, %52 : vector<2x23xf32>
    %68 = arith.mulf %67, %57 : vector<2x23xf32>
    %69 = arith.mulf %53, %55 : vector<2x23xf32>
    %70 = arith.subf %68, %69 : vector<2x23xf32>
    %c1 = arith.constant 1 : index
    %c0_35 = arith.constant 0 : index
    %c0_36 = arith.constant 0 : index
    %71 = vector.load %arg11[%c1, %c0_35, %c0_36] : memref<9x2x23xf32, #tpu.memory_space<vmem>>, vector<1x2x23xf32>
    %72 = vector.shape_cast %71 : vector<1x2x23xf32> to vector<2x23xf32>
    %73 = vector.shape_cast %70 : vector<2x23xf32> to vector<1x2x23xf32>
    tpu.vector_store %arg11[%c1, %c0_35, %c0_36], %73 {strides = array<i32>} : memref<9x2x23xf32, #tpu.memory_space<vmem>>, vector<1x2x23xf32>,
    %74 = arith.mulf %51, %53 : vector<2x23xf32>
    %75 = arith.mulf %74, %57 : vector<2x23xf32>
    %76 = arith.mulf %52, %55 : vector<2x23xf32>
    %77 = arith.addf %75, %76 : vector<2x23xf32>
    %c2 = arith.constant 2 : index
    %c0_37 = arith.constant 0 : index
    %c0_38 = arith.constant 0 : index
    %78 = vector.load %arg11[%c2, %c0_37, %c0_38] : memref<9x2x23xf32, #tpu.memory_space<vmem>>, vector<1x2x23xf32>
    %79 = vector.shape_cast %78 : vector<1x2x23xf32> to vector<2x23xf32>
    %80 = vector.shape_cast %77 : vector<2x23xf32> to vector<1x2x23xf32>
    tpu.vector_store %arg11[%c2, %c0_37, %c0_38], %80 {strides = array<i32>} : memref<9x2x23xf32, #tpu.memory_space<vmem>>, vector<1x2x23xf32>,
    %81 = arith.mulf %51, %52 : vector<2x23xf32>
    %82 = arith.mulf %81, %57 : vector<2x23xf32>
    %83 = arith.mulf %53, %55 : vector<2x23xf32>
    %84 = arith.addf %82, %83 : vector<2x23xf32>
    %c3 = arith.constant 3 : index
    %c0_39 = arith.constant 0 : index
    %c0_40 = arith.constant 0 : index
    %85 = vector.load %arg11[%c3, %c0_39, %c0_40] : memref<9x2x23xf32, #tpu.memory_space<vmem>>, vector<1x2x23xf32>
    %86 = vector.shape_cast %85 : vector<1x2x23xf32> to vector<2x23xf32>
    %87 = vector.shape_cast %84 : vector<2x23xf32> to vector<1x2x23xf32>
    tpu.vector_store %arg11[%c3, %c0_39, %c0_40], %87 {strides = array<i32>} : memref<9x2x23xf32, #tpu.memory_space<vmem>>, vector<1x2x23xf32>,
    %88 = arith.mulf %52, %52 : vector<2x23xf32>
    %89 = arith.mulf %52, %52 : vector<2x23xf32>
    %cst_41 = arith.constant 1.000000e+00 : f32
    %90 = vector.broadcast %cst_41 : f32 to vector<2x23xf32>
    %91 = arith.subf %90, %89 : vector<2x23xf32>
    %92 = arith.mulf %91, %54 : vector<2x23xf32>
    %93 = arith.addf %88, %92 : vector<2x23xf32>
    %c4 = arith.constant 4 : index
    %c0_42 = arith.constant 0 : index
    %c0_43 = arith.constant 0 : index
    %94 = vector.load %arg11[%c4, %c0_42, %c0_43] : memref<9x2x23xf32, #tpu.memory_space<vmem>>, vector<1x2x23xf32>
    %95 = vector.shape_cast %94 : vector<1x2x23xf32> to vector<2x23xf32>
    %96 = vector.shape_cast %93 : vector<2x23xf32> to vector<1x2x23xf32>
    tpu.vector_store %arg11[%c4, %c0_42, %c0_43], %96 {strides = array<i32>} : memref<9x2x23xf32, #tpu.memory_space<vmem>>, vector<1x2x23xf32>,
    %97 = arith.mulf %52, %53 : vector<2x23xf32>
    %98 = arith.mulf %97, %57 : vector<2x23xf32>
    %99 = arith.mulf %51, %55 : vector<2x23xf32>
    %100 = arith.subf %98, %99 : vector<2x23xf32>
    %c5 = arith.constant 5 : index
    %c0_44 = arith.constant 0 : index
    %c0_45 = arith.constant 0 : index
    %101 = vector.load %arg11[%c5, %c0_44, %c0_45] : memref<9x2x23xf32, #tpu.memory_space<vmem>>, vector<1x2x23xf32>
    %102 = vector.shape_cast %101 : vector<1x2x23xf32> to vector<2x23xf32>
    %103 = vector.shape_cast %100 : vector<2x23xf32> to vector<1x2x23xf32>
    tpu.vector_store %arg11[%c5, %c0_44, %c0_45], %103 {strides = array<i32>} : memref<9x2x23xf32, #tpu.memory_space<vmem>>, vector<1x2x23xf32>,
    %104 = arith.mulf %51, %53 : vector<2x23xf32>
    %105 = arith.mulf %104, %57 : vector<2x23xf32>
    %106 = arith.mulf %52, %55 : vector<2x23xf32>
    %107 = arith.subf %105, %106 : vector<2x23xf32>
    %c6 = arith.constant 6 : index
    %c0_46 = arith.constant 0 : index
    %c0_47 = arith.constant 0 : index
    %108 = vector.load %arg11[%c6, %c0_46, %c0_47] : memref<9x2x23xf32, #tpu.memory_space<vmem>>, vector<1x2x23xf32>
    %109 = vector.shape_cast %108 : vector<1x2x23xf32> to vector<2x23xf32>
    %110 = vector.shape_cast %107 : vector<2x23xf32> to vector<1x2x23xf32>
    tpu.vector_store %arg11[%c6, %c0_46, %c0_47], %110 {strides = array<i32>} : memref<9x2x23xf32, #tpu.memory_space<vmem>>, vector<1x2x23xf32>,
    %111 = arith.mulf %52, %53 : vector<2x23xf32>
    %112 = arith.mulf %111, %57 : vector<2x23xf32>
    %113 = arith.mulf %51, %55 : vector<2x23xf32>
    %114 = arith.addf %112, %113 : vector<2x23xf32>
    %c7 = arith.constant 7 : index
    %c0_48 = arith.constant 0 : index
    %c0_49 = arith.constant 0 : index
    %115 = vector.load %arg11[%c7, %c0_48, %c0_49] : memref<9x2x23xf32, #tpu.memory_space<vmem>>, vector<1x2x23xf32>
    %116 = vector.shape_cast %115 : vector<1x2x23xf32> to vector<2x23xf32>
    %117 = vector.shape_cast %114 : vector<2x23xf32> to vector<1x2x23xf32>
    tpu.vector_store %arg11[%c7, %c0_48, %c0_49], %117 {strides = array<i32>} : memref<9x2x23xf32, #tpu.memory_space<vmem>>, vector<1x2x23xf32>,
    %118 = arith.mulf %53, %53 : vector<2x23xf32>
    %119 = arith.mulf %53, %53 : vector<2x23xf32>
    %cst_50 = arith.constant 1.000000e+00 : f32
    %120 = vector.broadcast %cst_50 : f32 to vector<2x23xf32>
    %121 = arith.subf %120, %119 : vector<2x23xf32>
    %122 = arith.mulf %121, %54 : vector<2x23xf32>
    %123 = arith.addf %118, %122 : vector<2x23xf32>
    %c8 = arith.constant 8 : index
    %c0_51 = arith.constant 0 : index
    %c0_52 = arith.constant 0 : index
    %124 = vector.load %arg11[%c8, %c0_51, %c0_52] : memref<9x2x23xf32, #tpu.memory_space<vmem>>, vector<1x2x23xf32>
    %125 = vector.shape_cast %124 : vector<1x2x23xf32> to vector<2x23xf32>
    %126 = vector.shape_cast %123 : vector<2x23xf32> to vector<1x2x23xf32>
    tpu.vector_store %arg11[%c8, %c0_51, %c0_52], %126 {strides = array<i32>} : memref<9x2x23xf32, #tpu.memory_space<vmem>>, vector<1x2x23xf32>,
    return
  }
}

</mosaic_0001>

<llo_original>
// kernel: tpu_custom_call.1
$region0: #{tpu_custom_call.1}
  #allocation0 [shape = 'u32[]', space=smem, size = 0x4, offset = 0x4, fixed_abs, tag = 'smem constant byte address 0x4 - core index']
  #allocation1 [shape = 'u32[72,128]{1,0:T(1,128)}', space=vmem, size = 0x9000, scoped, tag = 'internal scratch']
  %s0 = inlined_call_operand.hbm [shape: f32[2,69], index: 0, kind: input, shape index: {}]
  %s1 = inlined_call_operand.hbm [shape: bf16[69,256], index: 1, kind: input, shape index: {}]
  %s2 = inlined_call_operand.hbm [shape: f32[1,256], index: 2, kind: input, shape index: {}]
  %s3 = inlined_call_operand.hbm [shape: bf16[256,256], index: 3, kind: input, shape index: {}]
  %s4 = inlined_call_operand.vmem [shape: f32[1,256], index: 4, kind: input, shape index: {}]
  %s5 = inlined_call_operand.hbm [shape: bf16[256,256], index: 5, kind: input, shape index: {}]
  %s6 = inlined_call_operand.vmem [shape: f32[1,256], index: 6, kind: input, shape index: {}]
  %s7 = inlined_call_operand.hbm [shape: bf16[256,256], index: 7, kind: input, shape index: {}]
  %s8 = inlined_call_operand.vmem [shape: f32[1,256], index: 8, kind: input, shape index: {}]
  %s9 = inlined_call_operand.hbm [shape: bf16[256,128], index: 9, kind: input, shape index: {}]
  %s10 = inlined_call_operand.vmem [shape: f32[1,128], index: 10, kind: input, shape index: {}]
  %s11 = inlined_call_operand.hbm [shape: f32[9,2,23], index: 11, kind: output, shape index: {}]
  %s12 = sld [smem:[#allocation0]]
  $region82: #{tpu_custom_call.1} parent=0
    _
  %s14 = ssub.s32 1, %s12
  %s15 = scalar_select 0, %s14, %s12
  $region1: #{tpu_custom_call.1} parent=0
    #allocation2 [shape = 'u8[1024]{0}', space=vmem, size = 0x400, scoped, tag = 'input window, operand 0, single buffered']
    #allocation3 [shape = 's32[1]{0}', space=sflag, size = 0x4, scoped, tag = 'scoped memory for tpu_custom_call.1']
    #allocation4 [shape = 's32[1]{0}', space=sflag, size = 0x4, scoped, tag = 'scoped memory for tpu_custom_call.1']
    #allocation5 [shape = 'u8[36864]{0}', space=vmem, size = 0x9000, scoped, tag = 'input window, operand 1, single buffered']
    #allocation6 [shape = 's32[1]{0}', space=sflag, size = 0x4, scoped, tag = 'scoped memory for tpu_custom_call.1']
    #allocation7 [shape = 'u8[1024]{0}', space=vmem, size = 0x400, scoped, tag = 'input window, operand 2, single buffered']
    #allocation8 [shape = 'u8[131072]{0}', space=vmem, size = 0x20000, scoped, tag = 'input window, operand 3, single buffered']
    #allocation9 [shape = 's32[1]{0}', space=sflag, size = 0x4, scoped, tag = 'scoped memory for tpu_custom_call.1']
    #allocation10 [shape = 'u8[131072]{0}', space=vmem, size = 0x20000, scoped, tag = 'input window, operand 5, single buffered']
    #allocation11 [shape = 'u8[131072]{0}', space=vmem, size = 0x20000, scoped, tag = 'input window, operand 7, single buffered']
    #allocation12 [shape = 's32[1]{0}', space=sflag, size = 0x4, scoped, tag = 'scoped memory for tpu_custom_call.1']
    #allocation13 [shape = 'u8[65536]{0}', space=vmem, size = 0x10000, scoped, tag = 'input window, operand 9, single buffered']
    #allocation14 [shape = 'u8[9216]{0}', space=vmem, size = 0x2400, scoped, tag = 'output window, operand 0, single buffered']
    %16 = vsyncpa [#allocation3], 0
    %17 = vsyncpa [#allocation6], 0
    %18 = vsyncpa [#allocation9], 0
    %19 = vsyncpa [#allocation12], 0
    %20 = vsyncpa [#allocation4], 0
    // Predicated region
    $region2: #{tpu_custom_call.1} parent=1 // pred_check
      _
    $region3: #{tpu_custom_call.1} parent=1 // pred_check_branch
      %22 = sbr.rel (0) target = $region5
    $region4: #{tpu_custom_call.1} parent=1 // pred_region
      %24 = vsyncadd [#allocation3], 0
      %s26 = sshll.u32 %s0, 4
      %s27 = int_to_ptr.hbm [resolvable:$true] %s26
      %s28 = sshll.u32 [#allocation2], 4
      %s29 = int_to_ptr.vmem [resolvable:$true] %s28
      %31 = dma.hbm_to_vmem [thread:$0]  %s27, 32, %s29, [#allocation3]
    $region5: #{tpu_custom_call.1} parent=1 // pred_fallthru
      _
    // Predicated region
    $region6: #{tpu_custom_call.1} parent=1 // pred_check
      _
    $region7: #{tpu_custom_call.1} parent=1 // pred_check_branch
      %33 = sbr.rel (0) target = $region9
    $region8: #{tpu_custom_call.1} parent=1 // pred_region
      %35 = vsyncadd [#allocation6], 0
      %s36 = sshll.u32 %s1, 4
      %s37 = int_to_ptr.hbm [resolvable:$true] %s36
      %s38 = sshll.u32 [#allocation5], 4
      %s39 = int_to_ptr.vmem [resolvable:$true] %s38
      %44 = dma.hbm_to_vmem [thread:$0]  %s37, 1152, %s39, [#allocation6], 128, 128, 8
    $region9: #{tpu_custom_call.1} parent=1 // pred_fallthru
      _
    // Predicated region
    $region10: #{tpu_custom_call.1} parent=1 // pred_check
      _
    $region11: #{tpu_custom_call.1} parent=1 // pred_check_branch
      %46 = sbr.rel (0) target = $region13
    $region12: #{tpu_custom_call.1} parent=1 // pred_region
      %48 = vsyncadd [#allocation6], 0
      %s50 = sshll.u32 %s2, 4
      %s51 = int_to_ptr.hbm [resolvable:$true] %s50
      %s52 = sshll.u32 [#allocation7], 4
      %s53 = int_to_ptr.vmem [resolvable:$true] %s52
      %55 = dma.hbm_to_vmem [thread:$0]  %s51, 32, %s53, [#allocation6]
    $region13: #{tpu_custom_call.1} parent=1 // pred_fallthru
      _
    // Predicated region
    $region14: #{tpu_custom_call.1} parent=1 // pred_check
      _
    $region15: #{tpu_custom_call.1} parent=1 // pred_check_branch
      %57 = sbr.rel (0) target = $region17
    $region16: #{tpu_custom_call.1} parent=1 // pred_region
      %59 = vsyncadd [#allocation9], 0
      %s60 = sshll.u32 %s3, 4
      %s61 = int_to_ptr.hbm [resolvable:$true] %s60
      %s62 = sshll.u32 [#allocation8], 4
      %s63 = int_to_ptr.vmem [resolvable:$true] %s62
      %68 = dma.hbm_to_vmem [thread:$0]  %s61, 4096, %s63, [#allocation9], 128, 128, 8
    $region17: #{tpu_custom_call.1} parent=1 // pred_fallthru
      _
    // Predicated region
    $region18: #{tpu_custom_call.1} parent=1 // pred_check
      _
    $region19: #{tpu_custom_call.1} parent=1 // pred_check_branch
      %70 = sbr.rel (0) target = $region21
    $region20: #{tpu_custom_call.1} parent=1 // pred_region
      _
    $region21: #{tpu_custom_call.1} parent=1 // pred_fallthru
      _
    // Predicated region
    $region22: #{tpu_custom_call.1} parent=1 // pred_check
      _
    $region23: #{tpu_custom_call.1} parent=1 // pred_check_branch
      %72 = sbr.rel (0) target = $region25
    $region24: #{tpu_custom_call.1} parent=1 // pred_region
      %74 = vsyncadd [#allocation9], 0
      %s75 = sshll.u32 %s5, 4
      %s76 = int_to_ptr.hbm [resolvable:$true] %s75
      %s77 = sshll.u32 [#allocation10], 4
      %s78 = int_to_ptr.vmem [resolvable:$true] %s77
      %83 = dma.hbm_to_vmem [thread:$0]  %s76, 4096, %s78, [#allocation9], 128, 128, 8
    $region25: #{tpu_custom_call.1} parent=1 // pred_fallthru
      _
    // Predicated region
    $region26: #{tpu_custom_call.1} parent=1 // pred_check
      _
    $region27: #{tpu_custom_call.1} parent=1 // pred_check_branch
      %85 = sbr.rel (0) target = $region29
    $region28: #{tpu_custom_call.1} parent=1 // pred_region
      _
    $region29: #{tpu_custom_call.1} parent=1 // pred_fallthru
      _
    // Predicated region
    $region30: #{tpu_custom_call.1} parent=1 // pred_check
      _
    $region31: #{tpu_custom_call.1} parent=1 // pred_check_branch
      %87 = sbr.rel (0) target = $region33
    $region32: #{tpu_custom_call.1} parent=1 // pred_region
      %89 = vsyncadd [#allocation12], 0
      %s90 = sshll.u32 %s7, 4
      %s91 = int_to_ptr.hbm [resolvable:$true] %s90
      %s92 = sshll.u32 [#allocation11], 4
      %s93 = int_to_ptr.vmem [resolvable:$true] %s92
      %98 = dma.hbm_to_vmem [thread:$0]  %s91, 4096, %s93, [#allocation12], 128, 128, 8
    $region33: #{tpu_custom_call.1} parent=1 // pred_fallthru
      _
    // Predicated region
    $region34: #{tpu_custom_call.1} parent=1 // pred_check
      _
    $region35: #{tpu_custom_call.1} parent=1 // pred_check_branch
      %100 = sbr.rel (0) target = $region37
    $region36: #{tpu_custom_call.1} parent=1 // pred_region
      _
    $region37: #{tpu_custom_call.1} parent=1 // pred_fallthru
      _
    // Predicated region
    $region38: #{tpu_custom_call.1} parent=1 // pred_check
      _
    $region39: #{tpu_custom_call.1} parent=1 // pred_check_branch
      %102 = sbr.rel (0) target = $region41
    $region40: #{tpu_custom_call.1} parent=1 // pred_region
      %104 = vsyncadd [#allocation12], 0
      %s105 = sshll.u32 %s9, 4
      %s106 = int_to_ptr.hbm [resolvable:$true] %s105
      %s107 = sshll.u32 [#allocation13], 4
      %s108 = int_to_ptr.vmem [resolvable:$true] %s107
      %113 = dma.hbm_to_vmem [thread:$0]  %s106, 2048, %s108, [#allocation12], 64, 64, 4
    $region41: #{tpu_custom_call.1} parent=1 // pred_fallthru
      _
    // Predicated region
    $region42: #{tpu_custom_call.1} parent=1 // pred_check
      _
    $region43: #{tpu_custom_call.1} parent=1 // pred_check_branch
      %115 = sbr.rel (0) target = $region45
    $region44: #{tpu_custom_call.1} parent=1 // pred_region
      _
    $region45: #{tpu_custom_call.1} parent=1 // pred_fallthru
      _
    // Predicated region
    $region46: #{tpu_custom_call.1} parent=1 // pred_check
      _
    $region47: #{tpu_custom_call.1} parent=1 // pred_check_branch
      %117 = sbr.rel (0) target = $region49
    $region48: #{tpu_custom_call.1} parent=1 // pred_region
      %119 = dma.done [#allocation3], 32
    $region49: #{tpu_custom_call.1} parent=1 // pred_fallthru
      _
    // Predicated region
    $region50: #{tpu_custom_call.1} parent=1 // pred_check
      _
    $region51: #{tpu_custom_call.1} parent=1 // pred_check_branch
      %121 = sbr.rel (0) target = $region53
    $region52: #{tpu_custom_call.1} parent=1 // pred_region
      %123 = dma.done [#allocation6], 1152
    $region53: #{tpu_custom_call.1} parent=1 // pred_fallthru
      _
    // Predicated region
    $region54: #{tpu_custom_call.1} parent=1 // pred_check
      _
    $region55: #{tpu_custom_call.1} parent=1 // pred_check_branch
      %125 = sbr.rel (0) target = $region57
    $region56: #{tpu_custom_call.1} parent=1 // pred_region
      %127 = dma.done [#allocation6], 32
    $region57: #{tpu_custom_call.1} parent=1 // pred_fallthru
      _
    // Predicated region
    $region58: #{tpu_custom_call.1} parent=1 // pred_check
      _
    $region59: #{tpu_custom_call.1} parent=1 // pred_check_branch
      %129 = sbr.rel (0) target = $region61
    $region60: #{tpu_custom_call.1} parent=1 // pred_region
      %131 = dma.done [#allocation9], 4096
    $region61: #{tpu_custom_call.1} parent=1 // pred_fallthru
      _
    // Predicated region
    $region62: #{tpu_custom_call.1} parent=1 // pred_check
      _
    $region63: #{tpu_custom_call.1} parent=1 // pred_check_branch
      %133 = sbr.rel (0) target = $region65
    $region64: #{tpu_custom_call.1} parent=1 // pred_region
      %135 = dma.done [#allocation9], 4096
    $region65: #{tpu_custom_call.1} parent=1 // pred_fallthru
      _
    // Predicated region
    $region66: #{tpu_custom_call.1} parent=1 // pred_check
      _
    $region67: #{tpu_custom_call.1} parent=1 // pred_check_branch
      %137 = sbr.rel (0) target = $region69
    $region68: #{tpu_custom_call.1} parent=1 // pred_region
      %139 = dma.done [#allocation12], 4096
    $region69: #{tpu_custom_call.1} parent=1 // pred_fallthru
      _
    // Predicated region
    $region70: #{tpu_custom_call.1} parent=1 // pred_check
      _
    $region71: #{tpu_custom_call.1} parent=1 // pred_check_branch
      %141 = sbr.rel (0) target = $region73
    $region72: #{tpu_custom_call.1} parent=1 // pred_region
      %143 = dma.done [#allocation12], 2048
    $region73: #{tpu_custom_call.1} parent=1 // pred_fallthru
      _
    %v145 = vld [vmem:[#allocation2] sm:$0x3]
    %v146 = vld [vmem:[#allocation5] sm:$0xff]
    %v147 = vld [vmem:[#allocation5 + $0x8] sm:$0xff]
    %v148 = vld [vmem:[#allocation5 + $0x10] sm:$0xff]
    %v149 = vld [vmem:[#allocation5 + $0x18] sm:$0xff]
    %v150 = vld [vmem:[#allocation5 + $0x20] sm:$0xff]
    %v151 = vld [vmem:[#allocation5 + $0x28] sm:$0xff]
    %v152 = vld [vmem:[#allocation5 + $0x30] sm:$0xff]
    %v153 = vld [vmem:[#allocation5 + $0x38] sm:$0xff]
    %v154 = vld [vmem:[#allocation5 + $0x40] sm:$0x77]
    %v155 = vld [vmem:[#allocation7] sm:$0x3]
    %v156 = vpack.c.bf16 %v145, %v145
    %v158 = vperm.slane %v155, 0
    %v159 = vperm.slane %v155, 1
    %v171 = vunpack.c.l.b16 %v146
    %v172 = vunpack.c.h.b16 %v146
    %v173 = vunpack.c.l.b16 %v147
    %v174 = vunpack.c.h.b16 %v147
    %v175 = vunpack.c.l.b16 %v148
    %v176 = vunpack.c.h.b16 %v148
    %v177 = vunpack.c.l.b16 %v149
    %v178 = vunpack.c.h.b16 %v149
    %v179 = vunpack.c.l.b16 %v150
    %v180 = vunpack.c.h.b16 %v150
    %v181 = vunpack.c.l.b16 %v151
    %v182 = vunpack.c.h.b16 %v151
    %v183 = vunpack.c.l.b16 %v152
    %v184 = vunpack.c.h.b16 %v152
    %v185 = vunpack.c.l.b16 %v153
    %v186 = vunpack.c.h.b16 %v153
    %v187 = vunpack.c.l.b16 %v154
    %v188 = vunpack.c.h.b16 %v154
    %v189 = vpack.c.b16 %v173, %v171
    %v190 = vpack.c.b16 %v174, %v172
    %v191 = vpack.c.b16 %v177, %v175
    %v192 = vpack.c.b16 %v178, %v176
    %v193 = vpack.c.b16 %v181, %v179
    %v194 = vpack.c.b16 %v182, %v180
    %v195 = vpack.c.b16 %v185, %v183
    %v196 = vpack.c.b16 %v186, %v184
    %v197 = vpack.c.b16 %v187, %v187
    %v198 = vpack.c.b16 %v188, %v188
    %vm207 = vcmask 564224
    %v209 = vsel %vm207, %v156, 0
    %vm211 = vcmask 1041408
    %vm212 = vcmask 1042432
    %v213 = vsel %vm211, 4294967295, 65535
    %v214 = vsel %vm212, %v213, 0
    %v216 = vand.u32 %v197, %v214
    %v219 = vand.u32 %v198, %v214
    %221 = vmatpush.bf16.msra.mxu0 0
    %222 = vmatpush.bf16.msra.mxu0 0
    %223 = vmatpush.bf16.msra.mxu0 0
    %224 = vmatpush.bf16.msra.mxu0 %v216
    %225 = vmatpush.bf16.msra.mxu0 %v195
    %226 = vmatpush.bf16.msra.mxu0 %v193
    %227 = vmatpush.bf16.msra.mxu0 %v191
    %228 = vmatpush.bf16.msra.mxu0 %v189
    %229 = vmatmul.bf16.gmra.mxu0 %v209
    %v230 = vpop.f32.mrf.mxu0
    %v231 = vadd.f32 %v158, %v230
    %v232 = vpop.f32.mrf.mxu0
    %233 = vdwg.mxu0
    %234 = vmatpush.bf16.msra.mxu0 0
    %235 = vmatpush.bf16.msra.mxu0 0
    %236 = vmatpush.bf16.msra.mxu0 0
    %237 = vmatpush.bf16.msra.mxu0 %v219
    %238 = vmatpush.bf16.msra.mxu0 %v196
    %239 = vmatpush.bf16.msra.mxu0 %v194
    %240 = vmatpush.bf16.msra.mxu0 %v192
    %241 = vmatpush.bf16.msra.mxu0 %v190
    %242 = vmatmul.bf16.gmra.mxu0 %v209
    %v243 = vpop.f32.mrf.mxu0
    %v244 = vadd.f32 %v159, %v243
    %v245 = vpop.f32.mrf.mxu0
    %246 = vdwg.mxu0
    %v247 = vmax.f32 %v231, 0.0
    %v248 = vmax.f32 %v244, 0.0
    %v249 = vld [vmem:[#allocation8] sm:$0xff]
    %v250 = vld [vmem:[#allocation8 + $0x8] sm:$0xff]
    %v251 = vld [vmem:[#allocation8 + $0x10] sm:$0xff]
    %v252 = vld [vmem:[#allocation8 + $0x18] sm:$0xff]
    %v253 = vld [vmem:[#allocation8 + $0x20] sm:$0xff]
    %v254 = vld [vmem:[#allocation8 + $0x28] sm:$0xff]
    %v255 = vld [vmem:[#allocation8 + $0x30] sm:$0xff]
    %v256 = vld [vmem:[#allocation8 + $0x38] sm:$0xff]
    %v257 = vld [vmem:[#allocation8 + $0x40] sm:$0xff]
    %v258 = vld [vmem:[#allocation8 + $0x48] sm:$0xff]
    %v259 = vld [vmem:[#allocation8 + $0x50] sm:$0xff]
    %v260 = vld [vmem:[#allocation8 + $0x58] sm:$0xff]
    %v261 = vld [vmem:[#allocation8 + $0x60] sm:$0xff]
    %v262 = vld [vmem:[#allocation8 + $0x68] sm:$0xff]
    %v263 = vld [vmem:[#allocation8 + $0x70] sm:$0xff]
    %v264 = vld [vmem:[#allocation8 + $0x78] sm:$0xff]
    %v265 = vld [vmem:[#allocation8 + $0x80] sm:$0xff]
    %v266 = vld [vmem:[#allocation8 + $0x88] sm:$0xff]
    %v267 = vld [vmem:[#allocation8 + $0x90] sm:$0xff]
    %v268 = vld [vmem:[#allocation8 + $0x98] sm:$0xff]
    %v269 = vld [vmem:[#allocation8 + $0xa0] sm:$0xff]
    %v270 = vld [vmem:[#allocation8 + $0xa8] sm:$0xff]
    %v271 = vld [vmem:[#allocation8 + $0xb0] sm:$0xff]
    %v272 = vld [vmem:[#allocation8 + $0xb8] sm:$0xff]
    %v273 = vld [vmem:[#allocation8 + $0xc0] sm:$0xff]
    %v274 = vld [vmem:[#allocation8 + $0xc8] sm:$0xff]
    %v275 = vld [vmem:[#allocation8 + $0xd0] sm:$0xff]
    %v276 = vld [vmem:[#allocation8 + $0xd8] sm:$0xff]
    %v277 = vld [vmem:[#allocation8 + $0xe0] sm:$0xff]
    %v278 = vld [vmem:[#allocation8 + $0xe8] sm:$0xff]
    %v279 = vld [vmem:[#allocation8 + $0xf0] sm:$0xff]
    %v280 = vld [vmem:[#allocation8 + $0xf8] sm:$0xff]
    %v281 = vld [vmem:[%s4] sm:$0x3]
    %v282 = vpack.c.bf16 %v247, %v247
    %v283 = vpack.c.bf16 %v248, %v248
    %v285 = vperm.slane %v281, 0
    %v286 = vperm.slane %v281, 1
    %v321 = vunpack.c.l.b16 %v249
    %v322 = vunpack.c.h.b16 %v249
    %v323 = vunpack.c.l.b16 %v250
    %v324 = vunpack.c.h.b16 %v250
    %v325 = vunpack.c.l.b16 %v251
    %v326 = vunpack.c.h.b16 %v251
    %v327 = vunpack.c.l.b16 %v252
    %v328 = vunpack.c.h.b16 %v252
    %v329 = vunpack.c.l.b16 %v253
    %v330 = vunpack.c.h.b16 %v253
    %v331 = vunpack.c.l.b16 %v254
    %v332 = vunpack.c.h.b16 %v254
    %v333 = vunpack.c.l.b16 %v255
    %v334 = vunpack.c.h.b16 %v255
    %v335 = vunpack.c.l.b16 %v256
    %v336 = vunpack.c.h.b16 %v256
    %v337 = vunpack.c.l.b16 %v257
    %v338 = vunpack.c.h.b16 %v257
    %v339 = vunpack.c.l.b16 %v258
    %v340 = vunpack.c.h.b16 %v258
    %v341 = vunpack.c.l.b16 %v259
    %v342 = vunpack.c.h.b16 %v259
    %v343 = vunpack.c.l.b16 %v260
    %v344 = vunpack.c.h.b16 %v260
    %v345 = vunpack.c.l.b16 %v261
    %v346 = vunpack.c.h.b16 %v261
    %v347 = vunpack.c.l.b16 %v262
    %v348 = vunpack.c.h.b16 %v262
    %v349 = vunpack.c.l.b16 %v263
    %v350 = vunpack.c.h.b16 %v263
    %v351 = vunpack.c.l.b16 %v264
    %v352 = vunpack.c.h.b16 %v264
    %v353 = vunpack.c.l.b16 %v265
    %v354 = vunpack.c.h.b16 %v265
    %v355 = vunpack.c.l.b16 %v266
    %v356 = vunpack.c.h.b16 %v266
    %v357 = vunpack.c.l.b16 %v267
    %v358 = vunpack.c.h.b16 %v267
    %v359 = vunpack.c.l.b16 %v268
    %v360 = vunpack.c.h.b16 %v268
    %v361 = vunpack.c.l.b16 %v269
    %v362 = vunpack.c.h.b16 %v269
    %v363 = vunpack.c.l.b16 %v270
    %v364 = vunpack.c.h.b16 %v270
    %v365 = vunpack.c.l.b16 %v271
    %v366 = vunpack.c.h.b16 %v271
    %v367 = vunpack.c.l.b16 %v272
    %v368 = vunpack.c.h.b16 %v272
    %v369 = vunpack.c.l.b16 %v273
    %v370 = vunpack.c.h.b16 %v273
    %v371 = vunpack.c.l.b16 %v274
    %v372 = vunpack.c.h.b16 %v274
    %v373 = vunpack.c.l.b16 %v275
    %v374 = vunpack.c.h.b16 %v275
    %v375 = vunpack.c.l.b16 %v276
    %v376 = vunpack.c.h.b16 %v276
    %v377 = vunpack.c.l.b16 %v277
    %v378 = vunpack.c.h.b16 %v277
    %v379 = vunpack.c.l.b16 %v278
    %v380 = vunpack.c.h.b16 %v278
    %v381 = vunpack.c.l.b16 %v279
    %v382 = vunpack.c.h.b16 %v279
    %v383 = vunpack.c.l.b16 %v280
    %v384 = vunpack.c.h.b16 %v280
    %v385 = vpack.c.b16 %v323, %v321
    %v386 = vpack.c.b16 %v324, %v322
    %v387 = vpack.c.b16 %v327, %v325
    %v388 = vpack.c.b16 %v328, %v326
    %v389 = vpack.c.b16 %v331, %v329
    %v390 = vpack.c.b16 %v332, %v330
    %v391 = vpack.c.b16 %v335, %v333
    %v392 = vpack.c.b16 %v336, %v334
    %v393 = vpack.c.b16 %v339, %v337
    %v394 = vpack.c.b16 %v340, %v338
    %v395 = vpack.c.b16 %v343, %v341
    %v396 = vpack.c.b16 %v344, %v342
    %v397 = vpack.c.b16 %v347, %v345
    %v398 = vpack.c.b16 %v348, %v346
    %v399 = vpack.c.b16 %v351, %v349
    %v400 = vpack.c.b16 %v352, %v350
    %v401 = vpack.c.b16 %v355, %v353
    %v402 = vpack.c.b16 %v356, %v354
    %v403 = vpack.c.b16 %v359, %v357
    %v404 = vpack.c.b16 %v360, %v358
    %v405 = vpack.c.b16 %v363, %v361
    %v406 = vpack.c.b16 %v364, %v362
    %v407 = vpack.c.b16 %v367, %v365
    %v408 = vpack.c.b16 %v368, %v366
    %v409 = vpack.c.b16 %v371, %v369
    %v410 = vpack.c.b16 %v372, %v370
    %v411 = vpack.c.b16 %v375, %v373
    %v412 = vpack.c.b16 %v376, %v374
    %v413 = vpack.c.b16 %v379, %v377
    %v414 = vpack.c.b16 %v380, %v378
    %v415 = vpack.c.b16 %v383, %v381
    %v416 = vpack.c.b16 %v384, %v382
    %449 = vmatpush.bf16.msra.mxu0 %v399
    %450 = vmatpush.bf16.msra.mxu0 %v397
    %451 = vmatpush.bf16.msra.mxu0 %v395
    %452 = vmatpush.bf16.msra.mxu0 %v393
    %453 = vmatpush.bf16.msra.mxu0 %v391
    %454 = vmatpush.bf16.msra.mxu0 %v389
    %455 = vmatpush.bf16.msra.mxu0 %v387
    %456 = vmatpush.bf16.msra.mxu0 %v385
    %457 = vmatmul.bf16.gmra.mxu0 %v282
    %v458 = vpop.f32.mrf.mxu0
    %v459 = vadd.f32 %v285, %v458
    %v460 = vpop.f32.mrf.mxu0
    %461 = vdwg.mxu0
    %462 = vmatpush.bf16.msra.mxu0 %v415
    %463 = vmatpush.bf16.msra.mxu0 %v413
    %464 = vmatpush.bf16.msra.mxu0 %v411
    %465 = vmatpush.bf16.msra.mxu0 %v409
    %466 = vmatpush.bf16.msra.mxu0 %v407
    %467 = vmatpush.bf16.msra.mxu0 %v405
    %468 = vmatpush.bf16.msra.mxu0 %v403
    %469 = vmatpush.bf16.msra.mxu0 %v401
    %470 = vmatmul.bf16.gmra.mxu0 %v283
    %v471 = vpop.f32.mrf.mxu0
    %v472 = vadd.f32 %v459, %v471
    %v473 = vpop.f32.mrf.mxu0
    %474 = vdwg.mxu0
    %475 = vmatpush.bf16.msra.mxu0 %v400
    %476 = vmatpush.bf16.msra.mxu0 %v398
    %477 = vmatpush.bf16.msra.mxu0 %v396
    %478 = vmatpush.bf16.msra.mxu0 %v394
    %479 = vmatpush.bf16.msra.mxu0 %v392
    %480 = vmatpush.bf16.msra.mxu0 %v390
    %481 = vmatpush.bf16.msra.mxu0 %v388
    %482 = vmatpush.bf16.msra.mxu0 %v386
    %483 = vmatmul.bf16.gmra.mxu0 %v282
    %v484 = vpop.f32.mrf.mxu0
    %v485 = vadd.f32 %v286, %v484
    %v486 = vpop.f32.mrf.mxu0
    %487 = vdwg.mxu0
    %488 = vmatpush.bf16.msra.mxu0 %v416
    %489 = vmatpush.bf16.msra.mxu0 %v414
    %490 = vmatpush.bf16.msra.mxu0 %v412
    %491 = vmatpush.bf16.msra.mxu0 %v410
    %492 = vmatpush.bf16.msra.mxu0 %v408
    %493 = vmatpush.bf16.msra.mxu0 %v406
    %494 = vmatpush.bf16.msra.mxu0 %v404
    %495 = vmatpush.bf16.msra.mxu0 %v402
    %496 = vmatmul.bf16.gmra.mxu0 %v283
    %v497 = vpop.f32.mrf.mxu0
    %v498 = vadd.f32 %v485, %v497
    %v499 = vpop.f32.mrf.mxu0
    %500 = vdwg.mxu0
    %v501 = vmax.f32 %v472, 0.0
    %v502 = vmax.f32 %v498, 0.0
    %v503 = vld [vmem:[#allocation10] sm:$0xff]
    %v504 = vld [vmem:[#allocation10 + $0x8] sm:$0xff]
    %v505 = vld [vmem:[#allocation10 + $0x10] sm:$0xff]
    %v506 = vld [vmem:[#allocation10 + $0x18] sm:$0xff]
    %v507 = vld [vmem:[#allocation10 + $0x20] sm:$0xff]
    %v508 = vld [vmem:[#allocation10 + $0x28] sm:$0xff]
    %v509 = vld [vmem:[#allocation10 + $0x30] sm:$0xff]
    %v510 = vld [vmem:[#allocation10 + $0x38] sm:$0xff]
    %v511 = vld [vmem:[#allocation10 + $0x40] sm:$0xff]
    %v512 = vld [vmem:[#allocation10 + $0x48] sm:$0xff]
    %v513 = vld [vmem:[#allocation10 + $0x50] sm:$0xff]
    %v514 = vld [vmem:[#allocation10 + $0x58] sm:$0xff]
    %v515 = vld [vmem:[#allocation10 + $0x60] sm:$0xff]
    %v516 = vld [vmem:[#allocation10 + $0x68] sm:$0xff]
    %v517 = vld [vmem:[#allocation10 + $0x70] sm:$0xff]
    %v518 = vld [vmem:[#allocation10 + $0x78] sm:$0xff]
    %v519 = vld [vmem:[#allocation10 + $0x80] sm:$0xff]
    %v520 = vld [vmem:[#allocation10 + $0x88] sm:$0xff]
    %v521 = vld [vmem:[#allocation10 + $0x90] sm:$0xff]
    %v522 = vld [vmem:[#allocation10 + $0x98] sm:$0xff]
    %v523 = vld [vmem:[#allocation10 + $0xa0] sm:$0xff]
    %v524 = vld [vmem:[#allocation10 + $0xa8] sm:$0xff]
    %v525 = vld [vmem:[#allocation10 + $0xb0] sm:$0xff]
    %v526 = vld [vmem:[#allocation10 + $0xb8] sm:$0xff]
    %v527 = vld [vmem:[#allocation10 + $0xc0] sm:$0xff]
    %v528 = vld [vmem:[#allocation10 + $0xc8] sm:$0xff]
    %v529 = vld [vmem:[#allocation10 + $0xd0] sm:$0xff]
    %v530 = vld [vmem:[#allocation10 + $0xd8] sm:$0xff]
    %v531 = vld [vmem:[#allocation10 + $0xe0] sm:$0xff]
    %v532 = vld [vmem:[#allocation10 + $0xe8] sm:$0xff]
    %v533 = vld [vmem:[#allocation10 + $0xf0] sm:$0xff]
    %v534 = vld [vmem:[#allocation10 + $0xf8] sm:$0xff]
    %v535 = vld [vmem:[%s6] sm:$0x3]
    %v536 = vpack.c.bf16 %v501, %v501
    %v537 = vpack.c.bf16 %v502, %v502
    %v539 = vperm.slane %v535, 0
    %v540 = vperm.slane %v535, 1
    %v575 = vunpack.c.l.b16 %v503
    %v576 = vunpack.c.h.b16 %v503
    %v577 = vunpack.c.l.b16 %v504
    %v578 = vunpack.c.h.b16 %v504
    %v579 = vunpack.c.l.b16 %v505
    %v580 = vunpack.c.h.b16 %v505
    %v581 = vunpack.c.l.b16 %v506
    %v582 = vunpack.c.h.b16 %v506
    %v583 = vunpack.c.l.b16 %v507
    %v584 = vunpack.c.h.b16 %v507
    %v585 = vunpack.c.l.b16 %v508
    %v586 = vunpack.c.h.b16 %v508
    %v587 = vunpack.c.l.b16 %v509
    %v588 = vunpack.c.h.b16 %v509
    %v589 = vunpack.c.l.b16 %v510
    %v590 = vunpack.c.h.b16 %v510
    %v591 = vunpack.c.l.b16 %v511
    %v592 = vunpack.c.h.b16 %v511
    %v593 = vunpack.c.l.b16 %v512
    %v594 = vunpack.c.h.b16 %v512
    %v595 = vunpack.c.l.b16 %v513
    %v596 = vunpack.c.h.b16 %v513
    %v597 = vunpack.c.l.b16 %v514
    %v598 = vunpack.c.h.b16 %v514
    %v599 = vunpack.c.l.b16 %v515
    %v600 = vunpack.c.h.b16 %v515
    %v601 = vunpack.c.l.b16 %v516
    %v602 = vunpack.c.h.b16 %v516
    %v603 = vunpack.c.l.b16 %v517
    %v604 = vunpack.c.h.b16 %v517
    %v605 = vunpack.c.l.b16 %v518
    %v606 = vunpack.c.h.b16 %v518
    %v607 = vunpack.c.l.b16 %v519
    %v608 = vunpack.c.h.b16 %v519
    %v609 = vunpack.c.l.b16 %v520
    %v610 = vunpack.c.h.b16 %v520
    %v611 = vunpack.c.l.b16 %v521
    %v612 = vunpack.c.h.b16 %v521
    %v613 = vunpack.c.l.b16 %v522
    %v614 = vunpack.c.h.b16 %v522
    %v615 = vunpack.c.l.b16 %v523
    %v616 = vunpack.c.h.b16 %v523
    %v617 = vunpack.c.l.b16 %v524
    %v618 = vunpack.c.h.b16 %v524
    %v619 = vunpack.c.l.b16 %v525
    %v620 = vunpack.c.h.b16 %v525
    %v621 = vunpack.c.l.b16 %v526
    %v622 = vunpack.c.h.b16 %v526
    %v623 = vunpack.c.l.b16 %v527
    %v624 = vunpack.c.h.b16 %v527
    %v625 = vunpack.c.l.b16 %v528
    %v626 = vunpack.c.h.b16 %v528
    %v627 = vunpack.c.l.b16 %v529
    %v628 = vunpack.c.h.b16 %v529
    %v629 = vunpack.c.l.b16 %v530
    %v630 = vunpack.c.h.b16 %v530
    %v631 = vunpack.c.l.b16 %v531
    %v632 = vunpack.c.h.b16 %v531
    %v633 = vunpack.c.l.b16 %v532
    %v634 = vunpack.c.h.b16 %v532
    %v635 = vunpack.c.l.b16 %v533
    %v636 = vunpack.c.h.b16 %v533
    %v637 = vunpack.c.l.b16 %v534
    %v638 = vunpack.c.h.b16 %v534
    %v639 = vpack.c.b16 %v577, %v575
    %v640 = vpack.c.b16 %v578, %v576
    %v641 = vpack.c.b16 %v581, %v579
    %v642 = vpack.c.b16 %v582, %v580
    %v643 = vpack.c.b16 %v585, %v583
    %v644 = vpack.c.b16 %v586, %v584
    %v645 = vpack.c.b16 %v589, %v587
    %v646 = vpack.c.b16 %v590, %v588
    %v647 = vpack.c.b16 %v593, %v591
    %v648 = vpack.c.b16 %v594, %v592
    %v649 = vpack.c.b16 %v597, %v595
    %v650 = vpack.c.b16 %v598, %v596
    %v651 = vpack.c.b16 %v601, %v599
    %v652 = vpack.c.b16 %v602, %v600
    %v653 = vpack.c.b16 %v605, %v603
    %v654 = vpack.c.b16 %v606, %v604
    %v655 = vpack.c.b16 %v609, %v607
    %v656 = vpack.c.b16 %v610, %v608
    %v657 = vpack.c.b16 %v613, %v611
    %v658 = vpack.c.b16 %v614, %v612
    %v659 = vpack.c.b16 %v617, %v615
    %v660 = vpack.c.b16 %v618, %v616
    %v661 = vpack.c.b16 %v621, %v619
    %v662 = vpack.c.b16 %v622, %v620
    %v663 = vpack.c.b16 %v625, %v623
    %v664 = vpack.c.b16 %v626, %v624
    %v665 = vpack.c.b16 %v629, %v627
    %v666 = vpack.c.b16 %v630, %v628
    %v667 = vpack.c.b16 %v633, %v631
    %v668 = vpack.c.b16 %v634, %v632
    %v669 = vpack.c.b16 %v637, %v635
    %v670 = vpack.c.b16 %v638, %v636
    %703 = vmatpush.bf16.msra.mxu0 %v653
    %704 = vmatpush.bf16.msra.mxu0 %v651
    %705 = vmatpush.bf16.msra.mxu0 %v649
    %706 = vmatpush.bf16.msra.mxu0 %v647
    %707 = vmatpush.bf16.msra.mxu0 %v645
    %708 = vmatpush.bf16.msra.mxu0 %v643
    %709 = vmatpush.bf16.msra.mxu0 %v641
    %710 = vmatpush.bf16.msra.mxu0 %v639
    %711 = vmatmul.bf16.gmra.mxu0 %v536
    %v712 = vpop.f32.mrf.mxu0
    %v713 = vadd.f32 %v539, %v712
    %v714 = vpop.f32.mrf.mxu0
    %715 = vdwg.mxu0
    %716 = vmatpush.bf16.msra.mxu0 %v669
    %717 = vmatpush.bf16.msra.mxu0 %v667
    %718 = vmatpush.bf16.msra.mxu0 %v665
    %719 = vmatpush.bf16.msra.mxu0 %v663
    %720 = vmatpush.bf16.msra.mxu0 %v661
    %721 = vmatpush.bf16.msra.mxu0 %v659
    %722 = vmatpush.bf16.msra.mxu0 %v657
    %723 = vmatpush.bf16.msra.mxu0 %v655
    %724 = vmatmul.bf16.gmra.mxu0 %v537
    %v725 = vpop.f32.mrf.mxu0
    %v726 = vadd.f32 %v713, %v725
    %v727 = vpop.f32.mrf.mxu0
    %728 = vdwg.mxu0
    %729 = vmatpush.bf16.msra.mxu0 %v654
    %730 = vmatpush.bf16.msra.mxu0 %v652
    %731 = vmatpush.bf16.msra.mxu0 %v650
    %732 = vmatpush.bf16.msra.mxu0 %v648
    %733 = vmatpush.bf16.msra.mxu0 %v646
    %734 = vmatpush.bf16.msra.mxu0 %v644
    %735 = vmatpush.bf16.msra.mxu0 %v642
    %736 = vmatpush.bf16.msra.mxu0 %v640
    %737 = vmatmul.bf16.gmra.mxu0 %v536
    %v738 = vpop.f32.mrf.mxu0
    %v739 = vadd.f32 %v540, %v738
    %v740 = vpop.f32.mrf.mxu0
    %741 = vdwg.mxu0
    %742 = vmatpush.bf16.msra.mxu0 %v670
    %743 = vmatpush.bf16.msra.mxu0 %v668
    %744 = vmatpush.bf16.msra.mxu0 %v666
    %745 = vmatpush.bf16.msra.mxu0 %v664
    %746 = vmatpush.bf16.msra.mxu0 %v662
    %747 = vmatpush.bf16.msra.mxu0 %v660
    %748 = vmatpush.bf16.msra.mxu0 %v658
    %749 = vmatpush.bf16.msra.mxu0 %v656
    %750 = vmatmul.bf16.gmra.mxu0 %v537
    %v751 = vpop.f32.mrf.mxu0
    %v752 = vadd.f32 %v739, %v751
    %v753 = vpop.f32.mrf.mxu0
    %754 = vdwg.mxu0
    %v755 = vmax.f32 %v726, 0.0
    %v756 = vmax.f32 %v752, 0.0
    %v757 = vld [vmem:[#allocation11] sm:$0xff]
    %v758 = vld [vmem:[#allocation11 + $0x8] sm:$0xff]
    %v759 = vld [vmem:[#allocation11 + $0x10] sm:$0xff]
    %v760 = vld [vmem:[#allocation11 + $0x18] sm:$0xff]
    %v761 = vld [vmem:[#allocation11 + $0x20] sm:$0xff]
    %v762 = vld [vmem:[#allocation11 + $0x28] sm:$0xff]
    %v763 = vld [vmem:[#allocation11 + $0x30] sm:$0xff]
    %v764 = vld [vmem:[#allocation11 + $0x38] sm:$0xff]
    %v765 = vld [vmem:[#allocation11 + $0x40] sm:$0xff]
    %v766 = vld [vmem:[#allocation11 + $0x48] sm:$0xff]
    %v767 = vld [vmem:[#allocation11 + $0x50] sm:$0xff]
    %v768 = vld [vmem:[#allocation11 + $0x58] sm:$0xff]
    %v769 = vld [vmem:[#allocation11 + $0x60] sm:$0xff]
    %v770 = vld [vmem:[#allocation11 + $0x68] sm:$0xff]
    %v771 = vld [vmem:[#allocation11 + $0x70] sm:$0xff]
    %v772 = vld [vmem:[#allocation11 + $0x78] sm:$0xff]
    %v773 = vld [vmem:[#allocation11 + $0x80] sm:$0xff]
    %v774 = vld [vmem:[#allocation11 + $0x88] sm:$0xff]
    %v775 = vld [vmem:[#allocation11 + $0x90] sm:$0xff]
    %v776 = vld [vmem:[#allocation11 + $0x98] sm:$0xff]
    %v777 = vld [vmem:[#allocation11 + $0xa0] sm:$0xff]
    %v778 = vld [vmem:[#allocation11 + $0xa8] sm:$0xff]
    %v779 = vld [vmem:[#allocation11 + $0xb0] sm:$0xff]
    %v780 = vld [vmem:[#allocation11 + $0xb8] sm:$0xff]
    %v781 = vld [vmem:[#allocation11 + $0xc0] sm:$0xff]
    %v782 = vld [vmem:[#allocation11 + $0xc8] sm:$0xff]
    %v783 = vld [vmem:[#allocation11 + $0xd0] sm:$0xff]
    %v784 = vld [vmem:[#allocation11 + $0xd8] sm:$0xff]
    %v785 = vld [vmem:[#allocation11 + $0xe0] sm:$0xff]
    %v786 = vld [vmem:[#allocation11 + $0xe8] sm:$0xff]
    %v787 = vld [vmem:[#allocation11 + $0xf0] sm:$0xff]
    %v788 = vld [vmem:[#allocation11 + $0xf8] sm:$0xff]
    %v789 = vld [vmem:[%s8] sm:$0x3]
    %v790 = vpack.c.bf16 %v755, %v755
    %v791 = vpack.c.bf16 %v756, %v756
    %v793 = vperm.slane %v789, 0
    %v794 = vperm.slane %v789, 1
    %v829 = vunpack.c.l.b16 %v757
    %v830 = vunpack.c.h.b16 %v757
    %v831 = vunpack.c.l.b16 %v758
    %v832 = vunpack.c.h.b16 %v758
    %v833 = vunpack.c.l.b16 %v759
    %v834 = vunpack.c.h.b16 %v759
    %v835 = vunpack.c.l.b16 %v760
    %v836 = vunpack.c.h.b16 %v760
    %v837 = vunpack.c.l.b16 %v761
    %v838 = vunpack.c.h.b16 %v761
    %v839 = vunpack.c.l.b16 %v762
    %v840 = vunpack.c.h.b16 %v762
    %v841 = vunpack.c.l.b16 %v763
    %v842 = vunpack.c.h.b16 %v763
    %v843 = vunpack.c.l.b16 %v764
    %v844 = vunpack.c.h.b16 %v764
    %v845 = vunpack.c.l.b16 %v765
    %v846 = vunpack.c.h.b16 %v765
    %v847 = vunpack.c.l.b16 %v766
    %v848 = vunpack.c.h.b16 %v766
    %v849 = vunpack.c.l.b16 %v767
    %v850 = vunpack.c.h.b16 %v767
    %v851 = vunpack.c.l.b16 %v768
    %v852 = vunpack.c.h.b16 %v768
    %v853 = vunpack.c.l.b16 %v769
    %v854 = vunpack.c.h.b16 %v769
    %v855 = vunpack.c.l.b16 %v770
    %v856 = vunpack.c.h.b16 %v770
    %v857 = vunpack.c.l.b16 %v771
    %v858 = vunpack.c.h.b16 %v771
    %v859 = vunpack.c.l.b16 %v772
    %v860 = vunpack.c.h.b16 %v772
    %v861 = vunpack.c.l.b16 %v773
    %v862 = vunpack.c.h.b16 %v773
    %v863 = vunpack.c.l.b16 %v774
    %v864 = vunpack.c.h.b16 %v774
    %v865 = vunpack.c.l.b16 %v775
    %v866 = vunpack.c.h.b16 %v775
    %v867 = vunpack.c.l.b16 %v776
    %v868 = vunpack.c.h.b16 %v776
    %v869 = vunpack.c.l.b16 %v777
    %v870 = vunpack.c.h.b16 %v777
    %v871 = vunpack.c.l.b16 %v778
    %v872 = vunpack.c.h.b16 %v778
    %v873 = vunpack.c.l.b16 %v779
    %v874 = vunpack.c.h.b16 %v779
    %v875 = vunpack.c.l.b16 %v780
    %v876 = vunpack.c.h.b16 %v780
    %v877 = vunpack.c.l.b16 %v781
    %v878 = vunpack.c.h.b16 %v781
    %v879 = vunpack.c.l.b16 %v782
    %v880 = vunpack.c.h.b16 %v782
    %v881 = vunpack.c.l.b16 %v783
    %v882 = vunpack.c.h.b16 %v783
    %v883 = vunpack.c.l.b16 %v784
    %v884 = vunpack.c.h.b16 %v784
    %v885 = vunpack.c.l.b16 %v785
    %v886 = vunpack.c.h.b16 %v785
    %v887 = vunpack.c.l.b16 %v786
    %v888 = vunpack.c.h.b16 %v786
    %v889 = vunpack.c.l.b16 %v787
    %v890 = vunpack.c.h.b16 %v787
    %v891 = vunpack.c.l.b16 %v788
    %v892 = vunpack.c.h.b16 %v788
    %v893 = vpack.c.b16 %v831, %v829
    %v894 = vpack.c.b16 %v832, %v830
    %v895 = vpack.c.b16 %v835, %v833
    %v896 = vpack.c.b16 %v836, %v834
    %v897 = vpack.c.b16 %v839, %v837
    %v898 = vpack.c.b16 %v840, %v838
    %v899 = vpack.c.b16 %v843, %v841
    %v900 = vpack.c.b16 %v844, %v842
    %v901 = vpack.c.b16 %v847, %v845
    %v902 = vpack.c.b16 %v848, %v846
    %v903 = vpack.c.b16 %v851, %v849
    %v904 = vpack.c.b16 %v852, %v850
    %v905 = vpack.c.b16 %v855, %v853
    %v906 = vpack.c.b16 %v856, %v854
    %v907 = vpack.c.b16 %v859, %v857
    %v908 = vpack.c.b16 %v860, %v858
    %v909 = vpack.c.b16 %v863, %v861
    %v910 = vpack.c.b16 %v864, %v862
    %v911 = vpack.c.b16 %v867, %v865
    %v912 = vpack.c.b16 %v868, %v866
    %v913 = vpack.c.b16 %v871, %v869
    %v914 = vpack.c.b16 %v872, %v870
    %v915 = vpack.c.b16 %v875, %v873
    %v916 = vpack.c.b16 %v876, %v874
    %v917 = vpack.c.b16 %v879, %v877
    %v918 = vpack.c.b16 %v880, %v878
    %v919 = vpack.c.b16 %v883, %v881
    %v920 = vpack.c.b16 %v884, %v882
    %v921 = vpack.c.b16 %v887, %v885
    %v922 = vpack.c.b16 %v888, %v886
    %v923 = vpack.c.b16 %v891, %v889
    %v924 = vpack.c.b16 %v892, %v890
    %957 = vmatpush.bf16.msra.mxu0 %v907
    %958 = vmatpush.bf16.msra.mxu0 %v905
    %959 = vmatpush.bf16.msra.mxu0 %v903
    %960 = vmatpush.bf16.msra.mxu0 %v901
    %961 = vmatpush.bf16.msra.mxu0 %v899
    %962 = vmatpush.bf16.msra.mxu0 %v897
    %963 = vmatpush.bf16.msra.mxu0 %v895
    %964 = vmatpush.bf16.msra.mxu0 %v893
    %965 = vmatmul.bf16.gmra.mxu0 %v790
    %v966 = vpop.f32.mrf.mxu0
    %v967 = vadd.f32 %v793, %v966
    %v968 = vpop.f32.mrf.mxu0
    %969 = vdwg.mxu0
    %970 = vmatpush.bf16.msra.mxu0 %v923
    %971 = vmatpush.bf16.msra.mxu0 %v921
    %972 = vmatpush.bf16.msra.mxu0 %v919
    %973 = vmatpush.bf16.msra.mxu0 %v917
    %974 = vmatpush.bf16.msra.mxu0 %v915
    %975 = vmatpush.bf16.msra.mxu0 %v913
    %976 = vmatpush.bf16.msra.mxu0 %v911
    %977 = vmatpush.bf16.msra.mxu0 %v909
    %978 = vmatmul.bf16.gmra.mxu0 %v791
    %v979 = vpop.f32.mrf.mxu0
    %v980 = vadd.f32 %v967, %v979
    %v981 = vpop.f32.mrf.mxu0
    %982 = vdwg.mxu0
    %983 = vmatpush.bf16.msra.mxu0 %v908
    %984 = vmatpush.bf16.msra.mxu0 %v906
    %985 = vmatpush.bf16.msra.mxu0 %v904
    %986 = vmatpush.bf16.msra.mxu0 %v902
    %987 = vmatpush.bf16.msra.mxu0 %v900
    %988 = vmatpush.bf16.msra.mxu0 %v898
    %989 = vmatpush.bf16.msra.mxu0 %v896
    %990 = vmatpush.bf16.msra.mxu0 %v894
    %991 = vmatmul.bf16.gmra.mxu0 %v790
    %v992 = vpop.f32.mrf.mxu0
    %v993 = vadd.f32 %v794, %v992
    %v994 = vpop.f32.mrf.mxu0
    %995 = vdwg.mxu0
    %996 = vmatpush.bf16.msra.mxu0 %v924
    %997 = vmatpush.bf16.msra.mxu0 %v922
    %998 = vmatpush.bf16.msra.mxu0 %v920
    %999 = vmatpush.bf16.msra.mxu0 %v918
    %1000 = vmatpush.bf16.msra.mxu0 %v916
    %1001 = vmatpush.bf16.msra.mxu0 %v914
    %1002 = vmatpush.bf16.msra.mxu0 %v912
    %1003 = vmatpush.bf16.msra.mxu0 %v910
    %1004 = vmatmul.bf16.gmra.mxu0 %v791
    %v1005 = vpop.f32.mrf.mxu0
    %v1006 = vadd.f32 %v993, %v1005
    %v1007 = vpop.f32.mrf.mxu0
    %1008 = vdwg.mxu0
    %v1009 = vmax.f32 %v980, 0.0
    %v1010 = vmax.f32 %v1006, 0.0
    %v1011 = vld [vmem:[#allocation13] sm:$0xf]
    %v1012 = vld [vmem:[#allocation13 + $0x4] sm:$0xf]
    %v1013 = vld [vmem:[#allocation13 + $0x8] sm:$0xf]
    %v1014 = vld [vmem:[#allocation13 + $0xc] sm:$0xf]
    %v1015 = vld [vmem:[#allocation13 + $0x10] sm:$0xf]
    %v1016 = vld [vmem:[#allocation13 + $0x14] sm:$0xf]
    %v1017 = vld [vmem:[#allocation13 + $0x18] sm:$0xf]
    %v1018 = vld [vmem:[#allocation13 + $0x1c] sm:$0xf]
    %v1019 = vld [vmem:[#allocation13 + $0x20] sm:$0xf]
    %v1020 = vld [vmem:[#allocation13 + $0x24] sm:$0xf]
    %v1021 = vld [vmem:[#allocation13 + $0x28] sm:$0xf]
    %v1022 = vld [vmem:[#allocation13 + $0x2c] sm:$0xf]
    %v1023 = vld [vmem:[#allocation13 + $0x30] sm:$0xf]
    %v1024 = vld [vmem:[#allocation13 + $0x34] sm:$0xf]
    %v1025 = vld [vmem:[#allocation13 + $0x38] sm:$0xf]
    %v1026 = vld [vmem:[#allocation13 + $0x3c] sm:$0xf]
    %v1027 = vld [vmem:[#allocation13 + $0x40] sm:$0xf]
    %v1028 = vld [vmem:[#allocation13 + $0x44] sm:$0xf]
    %v1029 = vld [vmem:[#allocation13 + $0x48] sm:$0xf]
    %v1030 = vld [vmem:[#allocation13 + $0x4c] sm:$0xf]
    %v1031 = vld [vmem:[#allocation13 + $0x50] sm:$0xf]
    %v1032 = vld [vmem:[#allocation13 + $0x54] sm:$0xf]
    %v1033 = vld [vmem:[#allocation13 + $0x58] sm:$0xf]
    %v1034 = vld [vmem:[#allocation13 + $0x5c] sm:$0xf]
    %v1035 = vld [vmem:[#allocation13 + $0x60] sm:$0xf]
    %v1036 = vld [vmem:[#allocation13 + $0x64] sm:$0xf]
    %v1037 = vld [vmem:[#allocation13 + $0x68] sm:$0xf]
    %v1038 = vld [vmem:[#allocation13 + $0x6c] sm:$0xf]
    %v1039 = vld [vmem:[#allocation13 + $0x70] sm:$0xf]
    %v1040 = vld [vmem:[#allocation13 + $0x74] sm:$0xf]
    %v1041 = vld [vmem:[#allocation13 + $0x78] sm:$0xf]
    %v1042 = vld [vmem:[#allocation13 + $0x7c] sm:$0xf]
    %v1043 = vld [vmem:[%s10] sm:$0x1]
    %v1044 = vpack.c.bf16 %v1009, %v1009
    %v1045 = vpack.c.bf16 %v1010, %v1010
    %v1047 = vperm.slane %v1043, 0
    %v1081 = vunpack.c.l.b16 %v1011
    %v1082 = vunpack.c.l.b16 %v1012
    %v1083 = vunpack.c.l.b16 %v1013
    %v1084 = vunpack.c.l.b16 %v1014
    %v1085 = vunpack.c.l.b16 %v1015
    %v1086 = vunpack.c.l.b16 %v1016
    %v1087 = vunpack.c.l.b16 %v1017
    %v1088 = vunpack.c.l.b16 %v1018
    %v1089 = vunpack.c.l.b16 %v1019
    %v1090 = vunpack.c.l.b16 %v1020
    %v1091 = vunpack.c.l.b16 %v1021
    %v1092 = vunpack.c.l.b16 %v1022
    %v1093 = vunpack.c.l.b16 %v1023
    %v1094 = vunpack.c.l.b16 %v1024
    %v1095 = vunpack.c.l.b16 %v1025
    %v1096 = vunpack.c.l.b16 %v1026
    %v1097 = vunpack.c.l.b16 %v1027
    %v1098 = vunpack.c.l.b16 %v1028
    %v1099 = vunpack.c.l.b16 %v1029
    %v1100 = vunpack.c.l.b16 %v1030
    %v1101 = vunpack.c.l.b16 %v1031
    %v1102 = vunpack.c.l.b16 %v1032
    %v1103 = vunpack.c.l.b16 %v1033
    %v1104 = vunpack.c.l.b16 %v1034
    %v1105 = vunpack.c.l.b16 %v1035
    %v1106 = vunpack.c.l.b16 %v1036
    %v1107 = vunpack.c.l.b16 %v1037
    %v1108 = vunpack.c.l.b16 %v1038
    %v1109 = vunpack.c.l.b16 %v1039
    %v1110 = vunpack.c.l.b16 %v1040
    %v1111 = vunpack.c.l.b16 %v1041
    %v1112 = vunpack.c.l.b16 %v1042
    %v1113 = vpack.c.b16 %v1082, %v1081
    %v1114 = vpack.c.b16 %v1084, %v1083
    %v1115 = vpack.c.b16 %v1086, %v1085
    %v1116 = vpack.c.b16 %v1088, %v1087
    %v1117 = vpack.c.b16 %v1090, %v1089
    %v1118 = vpack.c.b16 %v1092, %v1091
    %v1119 = vpack.c.b16 %v1094, %v1093
    %v1120 = vpack.c.b16 %v1096, %v1095
    %v1121 = vpack.c.b16 %v1098, %v1097
    %v1122 = vpack.c.b16 %v1100, %v1099
    %v1123 = vpack.c.b16 %v1102, %v1101
    %v1124 = vpack.c.b16 %v1104, %v1103
    %v1125 = vpack.c.b16 %v1106, %v1105
    %v1126 = vpack.c.b16 %v1108, %v1107
    %v1127 = vpack.c.b16 %v1110, %v1109
    %v1128 = vpack.c.b16 %v1112, %v1111
    %1145 = vmatpush.bf16.msra.mxu0 %v1120
    %1146 = vmatpush.bf16.msra.mxu0 %v1119
    %1147 = vmatpush.bf16.msra.mxu0 %v1118
    %1148 = vmatpush.bf16.msra.mxu0 %v1117
    %1149 = vmatpush.bf16.msra.mxu0 %v1116
    %1150 = vmatpush.bf16.msra.mxu0 %v1115
    %1151 = vmatpush.bf16.msra.mxu0 %v1114
    %1152 = vmatpush.bf16.msra.mxu0 %v1113
    %1153 = vmatmul.bf16.gmra.mxu0 %v1044
    %v1154 = vpop.f32.mrf.mxu0
    %v1155 = vadd.f32 %v1047, %v1154
    %v1156 = vpop.f32.mrf.mxu0
    %1157 = vdwg.mxu0
    %1158 = vmatpush.bf16.msra.mxu0 %v1128
    %1159 = vmatpush.bf16.msra.mxu0 %v1127
    %1160 = vmatpush.bf16.msra.mxu0 %v1126
    %1161 = vmatpush.bf16.msra.mxu0 %v1125
    %1162 = vmatpush.bf16.msra.mxu0 %v1124
    %1163 = vmatpush.bf16.msra.mxu0 %v1123
    %1164 = vmatpush.bf16.msra.mxu0 %v1122
    %1165 = vmatpush.bf16.msra.mxu0 %v1121
    %1166 = vmatmul.bf16.gmra.mxu0 %v1045
    %v1167 = vpop.f32.mrf.mxu0
    %v1168 = vadd.f32 %v1155, %v1167
    %v1169 = vpop.f32.mrf.mxu0
    %1170 = vdwg.mxu0
    %v1171 = vmul.f32 %v1168, %v1168
    %v1172 = vadd.f32 %v1171, 1e-05
    %1174 = vrot.lane.b32.xlu0 %v1171, 105
    %v1175 = vpop.permute.xlu0 %1174
    %v1177 = vadd.f32 %v1172, %v1175
    %1178 = vrot.lane.b32.xlu0 %v1171, 82
    %v1179 = vpop.permute.xlu0 %1178
    %v1181 = vadd.f32 %v1177, %v1179
    %v1182 = vrsqrt.pop %v1181
    %v1183 = vmul.f32 %v1182, %v1181
    %v1184 = vmul.f32 %v1183, %v1182
    %v1185 = vmul.f32 0.5, %v1184
    %v1186 = vsub.f32 1.5, %v1185
    %v1187 = vmul.f32 %v1182, %v1186
    %vm1188 = vweird.f32 %v1181
    %vm1189 = vweird.f32 %v1182
    %vm1190 = vmor %vm1188, %vm1189
    %v1191 = vsel %vm1190, %v1182, %v1187
    %v1192 = vmul.f32 %v1181, %v1191
    %v1193 = vmul.f32 %v1168, %v1191
    %1195 = vrot.lane.b32.xlu0 %v1191, 23
    %v1196 = vpop.permute.xlu0 %1195
    %v1198 = vmul.f32 %v1168, %v1196
    %1199 = vrot.lane.b32.xlu0 %v1191, 46
    %v1200 = vpop.permute.xlu0 %1199
    %v1202 = vmul.f32 %v1168, %v1200
    %v1203 = vand.u32 2147483647, %v1192
    %vm1204 = vcmp.le.f32.partialorder %v1203, 0.7853982
    %vm1205 = vcmp.lt.s32.totalorder %v1192, 0
    %v1206 = vand.u32 %v1192, 2139095040
    %v1207 = vshrl.u32 %v1206, 23
    %v1208 = vsub.s32 %v1207, 127
    %v1209 = vand.u32 2147483647, %v1192
    %v1210 = vand.u32 %v1209, 8388607
    %v1211 = vor.u32 %v1210, 8388608
    %v1212 = vsub.s32 0, %v1211
    %v1213 = vadd.s32 %v1208, 1
    %vm1214 = vcmp.gt.s32.totalorder %v1213, 0
    %v1215 = vsel %vm1214, %v1213, 0
    %v1216 = vshrl.u32 %v1215, 5
    %v1217 = vand.u32 %v1215, 31
    %v1218 = vsub.s32 32, %v1217
    %v1219 = vshrl.u32 683565275, %v1218
    %v1220 = vshll.u32 683565275, %v1217
    %v1221 = vshrl.u32 2475754826, %v1218
    %v1222 = vor.u32 %v1220, %v1221
    %v1223 = vshll.u32 2475754826, %v1217
    %v1224 = vshrl.u32 2131351028, %v1218
    %v1225 = vor.u32 %v1223, %v1224
    %v1226 = vshll.u32 2131351028, %v1217
    %v1227 = vshrl.u32 2102212464, %v1218
    %v1228 = vor.u32 %v1226, %v1227
    %v1229 = vshll.u32 2102212464, %v1217
    %v1230 = vshrl.u32 920167782, %v1218
    %v1231 = vor.u32 %v1229, %v1230
    %v1232 = vshll.u32 920167782, %v1217
    %v1233 = vshrl.u32 1326507024, %v1218
    %v1234 = vor.u32 %v1232, %v1233
    %vm1235 = vcmp.lt.s32.totalorder %v1216, 1
    %vm1236 = vcmp.lt.s32.totalorder %v1216, 2
    %vm1237 = vcmp.lt.s32.totalorder %v1216, 3
    %vm1238 = vcmp.lt.s32.totalorder %v1216, 4
    %v1239 = vsel %vm1235, %v1219, %v1222
    %v1240 = vsel %vm1238, %v1228, 2102212464
    %v1241 = vsel %vm1237, %v1225, %v1240
    %v1242 = vsel %vm1236, %v1239, %v1241
    %v1243 = vsel %vm1235, %v1222, %v1225
    %v1244 = vsel %vm1238, %v1231, 920167782
    %v1245 = vsel %vm1237, %v1228, %v1244
    %v1246 = vsel %vm1236, %v1243, %v1245
    %v1247 = vsel %vm1235, %v1225, %v1228
    %v1248 = vsel %vm1238, %v1234, 1326507024
    %v1249 = vsel %vm1237, %v1231, %v1248
    %v1250 = vsel %vm1236, %v1247, %v1249
    %v1251 = vshll.u32 %v1211, 8
    %v1252 = vand.u32 %v1251, 65535
    %v1253 = vshrl.u32 %v1251, 16
    %v1254 = vand.u32 %v1250, 65535
    %v1255 = vshrl.u32 %v1250, 16
    %v1256 = vmul.u32 %v1252, %v1254
    %v1257 = vmul.u32 %v1252, %v1255
    %v1258 = vmul.u32 %v1253, %v1254
    %v1259 = vmul.u32 %v1253, %v1255
    %v1260 = vshll.u32 %v1257, 16
    %v1261 = vshrl.u32 %v1257, 16
    %v1262 = vshll.u32 %v1258, 16
    %v1263 = vshrl.u32 %v1258, 16
    %vm1264 = vc.u32 %v1256, %v1260
    %v1265 = vsel %vm1264, 1, 0
    %v1266 = vadd.s32 %v1256, %v1260
    %v1267 = vadd.s32 %v1259, %v1265
    %vm1268 = vc.u32 %v1266, %v1262
    %v1269 = vsel %vm1268, 1, 0
    %v1270 = vadd.s32 %v1266, %v1262
    %v1271 = vadd.s32 %v1267, %v1269
    %v1272 = vadd.s32 %v1271, %v1261
    %v1273 = vadd.s32 %v1272, %v1263
    %v1274 = vand.u32 %v1251, 65535
    %v1275 = vshrl.u32 %v1251, 16
    %v1276 = vand.u32 %v1246, 65535
    %v1277 = vshrl.u32 %v1246, 16
    %v1278 = vmul.u32 %v1274, %v1276
    %v1279 = vmul.u32 %v1274, %v1277
    %v1280 = vmul.u32 %v1275, %v1276
    %v1281 = vmul.u32 %v1275, %v1277
    %v1282 = vshll.u32 %v1279, 16
    %v1283 = vshrl.u32 %v1279, 16
    %v1284 = vshll.u32 %v1280, 16
    %v1285 = vshrl.u32 %v1280, 16
    %vm1286 = vc.u32 %v1278, %v1282
    %v1287 = vsel %vm1286, 1, 0
    %v1288 = vadd.s32 %v1278, %v1282
    %v1289 = vadd.s32 %v1281, %v1287
    %vm1290 = vc.u32 %v1288, %v1284
    %v1291 = vsel %vm1290, 1, 0
    %v1292 = vadd.s32 %v1288, %v1284
    %v1293 = vadd.s32 %v1289, %v1291
    %v1294 = vadd.s32 %v1293, %v1283
    %v1295 = vadd.s32 %v1294, %v1285
    %v1296 = vmul.u32 %v1251, %v1242
    %v1297 = vadd.s32 %v1273, %v1292
    %vm1298 = vc.u32 %v1273, %v1292
    %v1299 = vadd.s32 %v1295, 1
    %v1300 = vsel %vm1298, %v1299, %v1295
    %v1301 = vadd.s32 %v1296, %v1300
    %v1302 = vadd.s32 %v1301, 536870912
    %v1303 = vshrl.u32 %v1302, 30
    %v1304 = vshll.u32 %v1303, 30
    %v1305 = vsub.s32 %v1301, %v1304
    %vm1306 = vcmp.lt.s32.totalorder %v1305, 0
    %v1307 = vsub.s32 0, %v1305
    %v1308 = vsel %vm1306, %v1307, %v1305
    %v1309 = vclz %v1308
    %v1310 = vsub.s32 %v1309, 2
    %vm1311 = vcmp.gt.s32.totalorder 0, %v1310
    %v1312 = vsel %vm1311, 0, %v1310
    %v1313 = vsub.s32 32, %v1312
    %v1314 = vshll.u32 %v1305, %v1312
    %v1315 = vshrl.u32 %v1297, %v1313
    %v1316 = vor.u32 %v1314, %v1315
    %v1317 = vsub.s32 4294967266, %v1312
    %v1318 = vadd.s32 %v1317, 127
    %v1319 = vshll.u32 %v1318, 23
    %v1320 = vor.u32 4788187, %v1319
    %v1321 = vand.u32 2147483647, %v1320
    %v1323 = vcvt.s32.f32 %v1316
    %v1324 = vmul.f32 %v1323, %v1321
    %v1325 = vxor.u32 %v1324, 2147483648
    %v1326 = vsel %vm1205, %v1325, %v1324
    %v1327 = vsub.s32 4, %v1303
    %v1328 = vsel %vm1205, %v1327, %v1303
    %v1329 = vsel %vm1204, %v1192, %v1326
    %v1330 = vsel %vm1204, 0, %v1328
    %v1331 = vmul.f32 %v1329, %v1329
    %v1332 = vmul.f32 %v1331, -0.001358992
    %v1333 = vadd.f32 %v1332, 0.041655596
    %v1334 = vmul.f32 %v1331, %v1333
    %v1335 = vadd.f32 %v1334, -0.4999988
    %v1336 = vmul.f32 %v1331, %v1335
    %v1337 = vadd.f32 1.0, %v1336
    %v1338 = vmul.f32 %v1329, %v1329
    %v1339 = vmul.f32 %v1338, -0.00019511016
    %v1340 = vadd.f32 %v1339, 0.008332121
    %v1341 = vmul.f32 %v1338, %v1340
    %v1342 = vadd.f32 %v1341, -0.16666654
    %v1343 = vmul.f32 %v1338, %v1342
    %v1344 = vadd.f32 %v1343, 1.0
    %v1345 = vmul.f32 %v1344, %v1329
    %vm1346 = vweird.f32 %v1192
    %v1347 = vand.u32 %v1330, 3
    %vm1348 = vcmp.lt.s32.totalorder %v1347, 2
    %vm1349 = vcmp.eq.s32.totalorder %v1347, 0
    %v1350 = vxor.u32 %v1345, 2147483648
    %v1351 = vsel %vm1349, %v1337, %v1350
    %vm1352 = vcmp.eq.s32.totalorder %v1347, 2
    %v1353 = vxor.u32 %v1337, 2147483648
    %v1354 = vsel %vm1352, %v1353, %v1345
    %v1355 = vsel %vm1348, %v1351, %v1354
    %v1356 = vsel %vm1346, nan, %v1355
    %v1357 = vand.u32 2147483647, %v1192
    %vm1358 = vcmp.le.f32.partialorder %v1357, 0.7853982
    %vm1359 = vcmp.lt.s32.totalorder %v1192, 0
    %v1360 = vand.u32 %v1192, 2139095040
    %v1361 = vshrl.u32 %v1360, 23
    %v1362 = vsub.s32 %v1361, 127
    %v1363 = vand.u32 2147483647, %v1192
    %v1364 = vand.u32 %v1363, 8388607
    %v1365 = vor.u32 %v1364, 8388608
    %v1366 = vsub.s32 0, %v1365
    %v1367 = vadd.s32 %v1362, 1
    %vm1368 = vcmp.gt.s32.totalorder %v1367, 0
    %v1369 = vsel %vm1368, %v1367, 0
    %v1370 = vshrl.u32 %v1369, 5
    %v1371 = vand.u32 %v1369, 31
    %v1372 = vsub.s32 32, %v1371
    %v1373 = vshrl.u32 683565275, %v1372
    %v1374 = vshll.u32 683565275, %v1371
    %v1375 = vshrl.u32 2475754826, %v1372
    %v1376 = vor.u32 %v1374, %v1375
    %v1377 = vshll.u32 2475754826, %v1371
    %v1378 = vshrl.u32 2131351028, %v1372
    %v1379 = vor.u32 %v1377, %v1378
    %v1380 = vshll.u32 2131351028, %v1371
    %v1381 = vshrl.u32 2102212464, %v1372
    %v1382 = vor.u32 %v1380, %v1381
    %v1383 = vshll.u32 2102212464, %v1371
    %v1384 = vshrl.u32 920167782, %v1372
    %v1385 = vor.u32 %v1383, %v1384
    %v1386 = vshll.u32 920167782, %v1371
    %v1387 = vshrl.u32 1326507024, %v1372
    %v1388 = vor.u32 %v1386, %v1387
    %vm1389 = vcmp.lt.s32.totalorder %v1370, 1
    %vm1390 = vcmp.lt.s32.totalorder %v1370, 2
    %vm1391 = vcmp.lt.s32.totalorder %v1370, 3
    %vm1392 = vcmp.lt.s32.totalorder %v1370, 4
    %v1393 = vsel %vm1389, %v1373, %v1376
    %v1394 = vsel %vm1392, %v1382, 2102212464
    %v1395 = vsel %vm1391, %v1379, %v1394
    %v1396 = vsel %vm1390, %v1393, %v1395
    %v1397 = vsel %vm1389, %v1376, %v1379
    %v1398 = vsel %vm1392, %v1385, 920167782
    %v1399 = vsel %vm1391, %v1382, %v1398
    %v1400 = vsel %vm1390, %v1397, %v1399
    %v1401 = vsel %vm1389, %v1379, %v1382
    %v1402 = vsel %vm1392, %v1388, 1326507024
    %v1403 = vsel %vm1391, %v1385, %v1402
    %v1404 = vsel %vm1390, %v1401, %v1403
    %v1405 = vshll.u32 %v1365, 8
    %v1406 = vand.u32 %v1405, 65535
    %v1407 = vshrl.u32 %v1405, 16
    %v1408 = vand.u32 %v1404, 65535
    %v1409 = vshrl.u32 %v1404, 16
    %v1410 = vmul.u32 %v1406, %v1408
    %v1411 = vmul.u32 %v1406, %v1409
    %v1412 = vmul.u32 %v1407, %v1408
    %v1413 = vmul.u32 %v1407, %v1409
    %v1414 = vshll.u32 %v1411, 16
    %v1415 = vshrl.u32 %v1411, 16
    %v1416 = vshll.u32 %v1412, 16
    %v1417 = vshrl.u32 %v1412, 16
    %vm1418 = vc.u32 %v1410, %v1414
    %v1419 = vsel %vm1418, 1, 0
    %v1420 = vadd.s32 %v1410, %v1414
    %v1421 = vadd.s32 %v1413, %v1419
    %vm1422 = vc.u32 %v1420, %v1416
    %v1423 = vsel %vm1422, 1, 0
    %v1424 = vadd.s32 %v1420, %v1416
    %v1425 = vadd.s32 %v1421, %v1423
    %v1426 = vadd.s32 %v1425, %v1415
    %v1427 = vadd.s32 %v1426, %v1417
    %v1428 = vand.u32 %v1405, 65535
    %v1429 = vshrl.u32 %v1405, 16
    %v1430 = vand.u32 %v1400, 65535
    %v1431 = vshrl.u32 %v1400, 16
    %v1432 = vmul.u32 %v1428, %v1430
    %v1433 = vmul.u32 %v1428, %v1431
    %v1434 = vmul.u32 %v1429, %v1430
    %v1435 = vmul.u32 %v1429, %v1431
    %v1436 = vshll.u32 %v1433, 16
    %v1437 = vshrl.u32 %v1433, 16
    %v1438 = vshll.u32 %v1434, 16
    %v1439 = vshrl.u32 %v1434, 16
    %vm1440 = vc.u32 %v1432, %v1436
    %v1441 = vsel %vm1440, 1, 0
    %v1442 = vadd.s32 %v1432, %v1436
    %v1443 = vadd.s32 %v1435, %v1441
    %vm1444 = vc.u32 %v1442, %v1438
    %v1445 = vsel %vm1444, 1, 0
    %v1446 = vadd.s32 %v1442, %v1438
    %v1447 = vadd.s32 %v1443, %v1445
    %v1448 = vadd.s32 %v1447, %v1437
    %v1449 = vadd.s32 %v1448, %v1439
    %v1450 = vmul.u32 %v1405, %v1396
    %v1451 = vadd.s32 %v1427, %v1446
    %vm1452 = vc.u32 %v1427, %v1446
    %v1453 = vadd.s32 %v1449, 1
    %v1454 = vsel %vm1452, %v1453, %v1449
    %v1455 = vadd.s32 %v1450, %v1454
    %v1456 = vadd.s32 %v1455, 536870912
    %v1457 = vshrl.u32 %v1456, 30
    %v1458 = vshll.u32 %v1457, 30
    %v1459 = vsub.s32 %v1455, %v1458
    %vm1460 = vcmp.lt.s32.totalorder %v1459, 0
    %v1461 = vsub.s32 0, %v1459
    %v1462 = vsel %vm1460, %v1461, %v1459
    %v1463 = vclz %v1462
    %v1464 = vsub.s32 %v1463, 2
    %vm1465 = vcmp.gt.s32.totalorder 0, %v1464
    %v1466 = vsel %vm1465, 0, %v1464
    %v1467 = vsub.s32 32, %v1466
    %v1468 = vshll.u32 %v1459, %v1466
    %v1469 = vshrl.u32 %v1451, %v1467
    %v1470 = vor.u32 %v1468, %v1469
    %v1471 = vsub.s32 4294967266, %v1466
    %v1472 = vadd.s32 %v1471, 127
    %v1473 = vshll.u32 %v1472, 23
    %v1474 = vor.u32 4788187, %v1473
    %v1475 = vand.u32 2147483647, %v1474
    %v1477 = vcvt.s32.f32 %v1470
    %v1478 = vmul.f32 %v1477, %v1475
    %v1479 = vxor.u32 %v1478, 2147483648
    %v1480 = vsel %vm1359, %v1479, %v1478
    %v1481 = vsub.s32 4, %v1457
    %v1482 = vsel %vm1359, %v1481, %v1457
    %v1483 = vsel %vm1358, %v1192, %v1480
    %v1484 = vsel %vm1358, 0, %v1482
    %v1485 = vmul.f32 %v1483, %v1483
    %v1486 = vmul.f32 %v1485, -0.001358992
    %v1487 = vadd.f32 %v1486, 0.041655596
    %v1488 = vmul.f32 %v1485, %v1487
    %v1489 = vadd.f32 %v1488, -0.4999988
    %v1490 = vmul.f32 %v1485, %v1489
    %v1491 = vadd.f32 1.0, %v1490
    %v1492 = vmul.f32 %v1483, %v1483
    %v1493 = vmul.f32 %v1492, -0.00019511016
    %v1494 = vadd.f32 %v1493, 0.008332121
    %v1495 = vmul.f32 %v1492, %v1494
    %v1496 = vadd.f32 %v1495, -0.16666654
    %v1497 = vmul.f32 %v1492, %v1496
    %v1498 = vadd.f32 %v1497, 1.0
    %v1499 = vmul.f32 %v1498, %v1483
    %vm1500 = vweird.f32 %v1192
    %v1501 = vadd.s32 %v1484, 3
    %v1502 = vand.u32 %v1501, 3
    %vm1503 = vcmp.lt.s32.totalorder %v1502, 2
    %vm1504 = vcmp.eq.s32.totalorder %v1502, 0
    %v1505 = vxor.u32 %v1499, 2147483648
    %v1506 = vsel %vm1504, %v1491, %v1505
    %vm1507 = vcmp.eq.s32.totalorder %v1502, 2
    %v1508 = vxor.u32 %v1491, 2147483648
    %v1509 = vsel %vm1507, %v1508, %v1499
    %v1510 = vsel %vm1503, %v1506, %v1509
    %v1511 = vsel %vm1500, nan, %v1510
    %v1512 = vsub.f32 1.0, %v1356
    %v1513 = vmul.f32 %v1193, %v1193
    %v1514 = vsub.f32 1.0, %v1513
    %v1515 = vmul.f32 %v1514, %v1356
    %v1516 = vadd.f32 %v1513, %v1515
    %vm1517 = vcmask 181248
    %1518 = vst.msk [vmem:[#allocation14] sm:$0x3] %vm1517, %v1516
    %1520 = vrot.lane.b32.xlu0 %v1198, 105
    %v1521 = vpop.permute.xlu0 %1520
    %v1523 = vmul.f32 %v1193, %v1521
    %v1524 = vmul.f32 %v1523, %v1512
    %1526 = vrot.lane.b32.xlu0 %v1511, 46
    %v1527 = vpop.permute.xlu0 %1526
    %v1529 = vmul.f32 %v1202, %v1527
    %1531 = vrot.lane.b32.xlu0 %v1529, 82
    %v1532 = vpop.permute.xlu0 %1531
    %v1534 = vsub.f32 %v1524, %v1532
    %s1535 = scalar_lea.vmem [#allocation14], 2
    %1536 = vst.msk [vmem:[%s1535] sm:$0x3] %vm1517, %v1534
    %1538 = vrot.lane.b32.xlu0 %v1202, 82
    %v1539 = vpop.permute.xlu0 %1538
    %v1541 = vmul.f32 %v1193, %v1539
    %v1542 = vmul.f32 %v1541, %v1512
    %1543 = vrot.lane.b32.xlu0 %v1511, 23
    %v1544 = vpop.permute.xlu0 %1543
    %v1546 = vmul.f32 %v1198, %v1544
    %1548 = vrot.lane.b32.xlu0 %v1546, 105
    %v1549 = vpop.permute.xlu0 %1548
    %v1551 = vadd.f32 %v1542, %v1549
    %s1552 = scalar_lea.vmem [#allocation14], 4
    %1553 = vst.msk [vmem:[%s1552] sm:$0x3] %vm1517, %v1551
    %v1554 = vadd.f32 %v1524, %v1532
    %s1555 = scalar_lea.vmem [#allocation14], 6
    %1556 = vst.msk [vmem:[%s1555] sm:$0x3] %vm1517, %v1554
    %v1557 = vmul.f32 %v1198, %v1198
    %v1558 = vsub.f32 1.0, %v1557
    %1560 = vrot.lane.b32.xlu0 %v1356, 23
    %v1561 = vpop.permute.xlu0 %1560
    %v1563 = vmul.f32 %v1558, %v1561
    %v1564 = vadd.f32 %v1557, %v1563
    %1566 = vrot.lane.b32.xlu0 %v1564, 105
    %v1567 = vpop.permute.xlu0 %1566
    %s1569 = scalar_lea.vmem [#allocation14], 8
    %1570 = vst.msk [vmem:[%s1569] sm:$0x3] %vm1517, %v1567
    %1571 = vrot.lane.b32.xlu0 %v1202, 105
    %v1572 = vpop.permute.xlu0 %1571
    %v1574 = vmul.f32 %v1198, %v1572
    %1576 = vrot.lane.b32.xlu0 %v1512, 23
    %v1577 = vpop.permute.xlu0 %1576
    %v1579 = vmul.f32 %v1574, %v1577
    %v1580 = vmul.f32 %v1193, %v1511
    %1582 = vrot.lane.b32.xlu0 %v1580, 23
    %v1583 = vpop.permute.xlu0 %1582
    %v1585 = vsub.f32 %v1579, %v1583
    %1587 = vrot.lane.b32.xlu0 %v1585, 105
    %v1588 = vpop.permute.xlu0 %1587
    %s1590 = scalar_lea.vmem [#allocation14], 10
    %1591 = vst.msk [vmem:[%s1590] sm:$0x3] %vm1517, %v1588
    %v1592 = vsub.f32 %v1542, %v1549
    %s1593 = scalar_lea.vmem [#allocation14], 12
    %1594 = vst.msk [vmem:[%s1593] sm:$0x3] %vm1517, %v1592
    %v1595 = vadd.f32 %v1579, %v1583
    %1597 = vrot.lane.b32.xlu0 %v1595, 105
    %v1598 = vpop.permute.xlu0 %1597
    %s1600 = scalar_lea.vmem [#allocation14], 14
    %1601 = vst.msk [vmem:[%s1600] sm:$0x3] %vm1517, %v1598
    %v1602 = vmul.f32 %v1202, %v1202
    %v1603 = vsub.f32 1.0, %v1602
    %1604 = vrot.lane.b32.xlu0 %v1356, 46
    %v1605 = vpop.permute.xlu0 %1604
    %v1607 = vmul.f32 %v1603, %v1605
    %v1608 = vadd.f32 %v1602, %v1607
    %1610 = vrot.lane.b32.xlu0 %v1608, 82
    %v1611 = vpop.permute.xlu0 %1610
    %s1613 = scalar_lea.vmem [#allocation14], 16
    %1614 = vst.msk [vmem:[%s1613] sm:$0x3] %vm1517, %v1611
    // Predicated region
    $region74: #{tpu_custom_call.1} parent=1 // pred_check
      _
    $region75: #{tpu_custom_call.1} parent=1 // pred_check_branch
      %1616 = sbr.rel (0) target = $region77
    $region76: #{tpu_custom_call.1} parent=1 // pred_region
      %1618 = vsyncadd [#allocation4], 0
      %s1619 = sshll.u32 [#allocation14], 4
      %s1620 = int_to_ptr.vmem [resolvable:$true] %s1619
      %s1621 = sshll.u32 %s11, 4
      %s1622 = int_to_ptr.hbm [resolvable:$true] %s1621
      %1627 = dma.vmem_to_hbm [thread:$0]  %s1620, 288, %s1622, [#allocation4], 32, 32, 2
    $region77: #{tpu_custom_call.1} parent=1 // pred_fallthru
      _
    // Predicated region
    $region78: #{tpu_custom_call.1} parent=1 // pred_check
      _
    $region79: #{tpu_custom_call.1} parent=1 // pred_check_branch
      %1629 = sbr.rel (0) target = $region81
    $region80: #{tpu_custom_call.1} parent=1 // pred_region
      %1631 = dma.done [#allocation4], 288
    $region81: #{tpu_custom_call.1} parent=1 // pred_fallthru
      _
    %1632 = vsyncpa [#allocation3], 1
    %1633 = vsyncpa [#allocation6], 1
    %1634 = vsyncpa [#allocation9], 1
    %1635 = vsyncpa [#allocation12], 1
    %1636 = vsyncpa [#allocation4], 1

</llo_original>
